<compile_context>
chip_gen: v7x
topology: tpu7x:2x2x1
jax: 0.10.0
libtpu: 0.0.40
codegen_flags: <defaults>
</compile_context>

<pallas_src>
import functools

import jax
import jax.numpy as jnp
from jax import lax
from jax.experimental import pallas as pl
from jax.experimental.pallas import tpu as pltpu

_CBLK = 128  # lane-dense channel tile


def _dw_conv_bn_relu_kernel(x_ref, w_ref, b_ref, o_ref, *, stride, th, ow):
    """One (batch, channel-tile, row-tile) grid step.

    x_ref: (1, H, W, CBLK)   input rows for this batch/channel tile (resident
                             across the innermost row-tile grid axis)
    w_ref: (3, 3, CBLK)      depthwise weights with BN scale pre-folded
    b_ref: (1, 1, CBLK)      folded BN bias
    o_ref: (1, TH, OW, CBLK) output row tile
    """
    ti = pl.program_id(2)                      # row-tile index
    w_full = x_ref.shape[2]                    # input width
    valid = w_full - 2                         # stride-1 conv positions along W

    # Hoisted per-channel taps / bias (tiny, lane-dense (CBLK,) vectors).
    wv = w_ref[...].astype(jnp.float32)                         # (3, 3, CBLK)
    taps = [[wv[kh, kw] for kw in range(3)] for kh in range(3)]
    bias = b_ref[0, 0].astype(jnp.float32)                      # (CBLK,)

    row0 = ti * th                              # first output row of this tile
    for r in range(th):                         # static unroll, th <= 8
        base = (row0 + r) * stride              # first input row for this output row
        acc = None
        for kh in range(3):
            line = x_ref[0, base + kh].astype(jnp.float32)      # (W, CBLK)
            for kw in range(3):
                contrib = line[kw:kw + valid, :] * taps[kh][kw]  # (W-2, CBLK)
                acc = contrib if acc is None else acc + contrib
        if stride == 1:
            row_out = acc                       # valid == OW
        else:
            # One column subsample per output row (instead of one per tap).
            row_out = acc[0:(ow - 1) * stride + 1:stride, :]
        o_ref[0, r] = jnp.maximum(row_out + bias, 0.0).astype(o_ref.dtype)


def dw_conv_forward(x_nchw, weight_oihw, gamma, beta, running_mean, running_var,
                    *, stride=1, eps=1e-5):
    """dw_conv forward: depthwise conv3x3 (VALID, no bias) -> BN(eval) -> ReLU.

    x_nchw:      (N, C, H, W)
    weight_oihw: (C, 1, 3, 3)
    gamma/beta/running_mean/running_var: (C,)
    Returns (N, C, OH, OW) with OH = (H-3)//stride + 1, OW = (W-3)//stride + 1.
    """
    n, c, h, w = x_nchw.shape
    if h < 3 or w < 3:
        raise ValueError("spatial dims must be >= 3 for a 3x3 VALID conv")
    oh = (h - 3) // stride + 1
    ow = (w - 3) // stride + 1

    # ---- parameter prep (tiny tensors; BN scale folded into the weights) ----
    scale = gamma / jnp.sqrt(running_var + eps)                  # (C,)
    bias = beta - running_mean * scale                           # (C,)
    w_hwc = jnp.transpose(weight_oihw[:, 0, :, :], (1, 2, 0))    # (3, 3, C)
    w_hwc = w_hwc * scale[None, None, :]

    # ---- lane-dense layout: NHWC with C padded to a multiple of 128 ----
    c_pad = ((c + _CBLK - 1) // _CBLK) * _CBLK
    x_nhwc = jnp.transpose(x_nchw, (0, 2, 3, 1))                 # (N, H, W, C)
    if c_pad != c:
        x_nhwc = jnp.pad(x_nhwc, ((0, 0), (0, 0), (0, 0), (0, c_pad - c)))
        w_hwc = jnp.pad(w_hwc, ((0, 0), (0, 0), (0, c_pad - c)))
        bias = jnp.pad(bias, ((0, c_pad - c),))
    bias2 = bias.reshape(1, 1, c_pad)

    # ---- row tiling: th output rows per grid step (largest divisor of OH <= 8) ----
    th = 1
    for d in range(min(oh, 8), 0, -1):
        if oh % d == 0:
            th = d
            break
    n_row_tiles = oh // th
    n_c_tiles = c_pad // _CBLK

    kernel = functools.partial(_dw_conv_bn_relu_kernel, stride=stride, th=th, ow=ow)

    itemsize = jnp.dtype(x_nhwc.dtype).itemsize
    in_block_bytes = h * w * _CBLK * itemsize
    out_block_bytes = th * ow * _CBLK * itemsize
    # Raise the (v5e 16 MiB) scoped-VMEM default when needed; stay well under the
    # 64 MiB physical VMEM of v7x.
    vmem_limit = int(min(max(32 * 2**20, 2 * (in_block_bytes + out_block_bytes) + (4 << 20)),
                         48 * 2**20))

    out_nhwc = pl.pallas_call(
        kernel,
        out_shape=jax.ShapeDtypeStruct((n, oh, ow, c_pad), x_nchw.dtype),
        grid_spec=pltpu.PrefetchScalarGridSpec(
            num_scalar_prefetch=0,
            grid=(n, n_c_tiles, n_row_tiles),
            in_specs=[
                # Input rows: constant along the row-tile axis -> fetched once per
                # (batch, channel-tile) and reused from VMEM by every row tile.
                pl.BlockSpec((1, h, w, _CBLK), lambda b, cb, ti: (b, 0, 0, cb)),
                pl.BlockSpec((3, 3, _CBLK), lambda b, cb, ti: (0, 0, cb)),
                pl.BlockSpec((1, 1, _CBLK), lambda b, cb, ti: (0, 0, cb)),
            ],
            out_specs=pl.BlockSpec((1, th, ow, _CBLK), lambda b, cb, ti: (b, ti, 0, cb)),
        ),
        compiler_params=pltpu.CompilerParams(
            dimension_semantics=("parallel", "parallel", "arbitrary"),
            vmem_limit_bytes=vmem_limit,
        ),
    )(x_nhwc, w_hwc, bias2)

    out = out_nhwc[..., :c]                     # drop channel padding
    return jnp.transpose(out, (0, 3, 1, 2))     # back to NCHW


def _reference_forward(x_nchw, weight_oihw, gamma, beta, running_mean, running_var,
                       *, stride=1, eps=1e-5):
    """Pure-JAX reference (lax depthwise conv + eval-mode BN + ReLU)."""
    c = x_nchw.shape[1]
    y = lax.conv_general_dilated(
        x_nchw, weight_oihw,
        window_strides=(stride, stride), padding="VALID",
        dimension_numbers=("NCHW", "OIHW", "NCHW"),
        feature_group_count=c,
    )
    scale = (gamma / jnp.sqrt(running_var + eps)).reshape(1, c, 1, 1)
    bias = (beta - running_mean * gamma / jnp.sqrt(running_var + eps)).reshape(1, c, 1, 1)
    return jnp.maximum(y * scale + bias, 0.0)


def _make_inputs(key, n, c, h, w):
    kx, kw, kg, kb, km, kv = jax.random.split(key, 6)
    x = jax.random.normal(kx, (n, c, h, w), dtype=jnp.float32)
    weight = jax.random.normal(kw, (c, 1, 3, 3), dtype=jnp.float32) * 0.2
    gamma = 1.0 + 0.1 * jax.random.normal(kg, (c,), dtype=jnp.float32)
    beta = 0.1 * jax.random.normal(kb, (c,), dtype=jnp.float32)
    running_mean = 0.1 * jax.random.normal(km, (c,), dtype=jnp.float32)
    running_var = jnp.abs(1.0 + 0.1 * jax.random.normal(kv, (c,), dtype=jnp.float32))
    return x, weight, gamma, beta, running_mean, running_var


if __name__ == "__main__":
    key = jax.random.PRNGKey(0)
    k1, k2 = jax.random.split(key)

    # Case 1: small C (exercises channel padding to one 128-lane tile), batch=2.
    N, C, H, W, stride = 2, 4, 16, 16, 1
    args = _make_inputs(k1, N, C, H, W)
    out = jax.block_until_ready(dw_conv_forward(*args, stride=stride))
    ref = _reference_forward(*args, stride=stride)
    assert out.shape == ref.shape == (N, C, (H - 3) // stride + 1, (W - 3) // stride + 1)
    assert jnp.allclose(out, ref, atol=1e-4, rtol=1e-4)

    # Case 2: multiple channel tiles (C=256 -> 2 lane-dense tiles), batch=1.
    N2, C2, H2, W2 = 1, 256, 12, 12
    args2 = _make_inputs(k2, N2, C2, H2, W2)
    out2 = jax.block_until_ready(dw_conv_forward(*args2, stride=1))
    ref2 = _reference_forward(*args2, stride=1)
    assert out2.shape == ref2.shape
    assert jnp.allclose(out2, ref2, atol=1e-4, rtol=1e-4)

    print("KERNEL_OK")
</pallas_src>

<mosaic_0001>
module attributes {stable_mosaic.version = 11 : i64} {
  func.func @_dw_conv_bn_relu_kernel(%arg0: i32, %arg1: i32, %arg2: i32, %arg3: memref<1x16x16x128xf32, #tpu.memory_space<vmem>>, %arg4: memref<3x3x128xf32, #tpu.memory_space<vmem>>, %arg5: memref<1x1x128xf32, #tpu.memory_space<vmem>>, %arg6: memref<1x7x14x128xf32, #tpu.memory_space<vmem>>) attributes {dimension_semantics = [#tpu.dimension_semantics<parallel>, #tpu.dimension_semantics<parallel>, #tpu.dimension_semantics<arbitrary>], iteration_bounds = array<i64: 2, 1, 2>, scalar_prefetch = 0 : i64, scratch_operands = 0 : i64, tpu.core_type = #tpu.core_type<tc>, window_params = [{transform_indices = @transform_0, window_bounds = array<i64: 1, 16, 16, 128>}, {transform_indices = @transform_1, window_bounds = array<i64: 3, 3, 128>}, {transform_indices = @transform_2, window_bounds = array<i64: 1, 1, 128>}, {transform_indices = @transform_3, window_bounds = array<i64: 1, 7, 14, 128>}]} {
    %c0 = arith.constant 0 : index
    %c0_0 = arith.constant 0 : index
    %c0_1 = arith.constant 0 : index
    %0 = vector.load %arg4[%c0, %c0_0, %c0_1] : memref<3x3x128xf32, #tpu.memory_space<vmem>>, vector<3x3x128xf32>
    %1 = vector.extract_strided_slice %0 {offsets = [0, 0, 0], sizes = [1, 1, 128], strides = [1, 1, 1]} : vector<3x3x128xf32> to vector<1x1x128xf32>
    %2 = vector.shape_cast %1 : vector<1x1x128xf32> to vector<128xf32>
    %3 = vector.extract_strided_slice %0 {offsets = [0, 1, 0], sizes = [1, 1, 128], strides = [1, 1, 1]} : vector<3x3x128xf32> to vector<1x1x128xf32>
    %4 = vector.shape_cast %3 : vector<1x1x128xf32> to vector<128xf32>
    %5 = vector.extract_strided_slice %0 {offsets = [0, 2, 0], sizes = [1, 1, 128], strides = [1, 1, 1]} : vector<3x3x128xf32> to vector<1x1x128xf32>
    %6 = vector.shape_cast %5 : vector<1x1x128xf32> to vector<128xf32>
    %7 = vector.extract_strided_slice %0 {offsets = [1, 0, 0], sizes = [1, 1, 128], strides = [1, 1, 1]} : vector<3x3x128xf32> to vector<1x1x128xf32>
    %8 = vector.shape_cast %7 : vector<1x1x128xf32> to vector<128xf32>
    %9 = vector.extract_strided_slice %0 {offsets = [1, 1, 0], sizes = [1, 1, 128], strides = [1, 1, 1]} : vector<3x3x128xf32> to vector<1x1x128xf32>
    %10 = vector.shape_cast %9 : vector<1x1x128xf32> to vector<128xf32>
    %11 = vector.extract_strided_slice %0 {offsets = [1, 2, 0], sizes = [1, 1, 128], strides = [1, 1, 1]} : vector<3x3x128xf32> to vector<1x1x128xf32>
    %12 = vector.shape_cast %11 : vector<1x1x128xf32> to vector<128xf32>
    %13 = vector.extract_strided_slice %0 {offsets = [2, 0, 0], sizes = [1, 1, 128], strides = [1, 1, 1]} : vector<3x3x128xf32> to vector<1x1x128xf32>
    %14 = vector.shape_cast %13 : vector<1x1x128xf32> to vector<128xf32>
    %15 = vector.extract_strided_slice %0 {offsets = [2, 1, 0], sizes = [1, 1, 128], strides = [1, 1, 1]} : vector<3x3x128xf32> to vector<1x1x128xf32>
    %16 = vector.shape_cast %15 : vector<1x1x128xf32> to vector<128xf32>
    %17 = vector.extract_strided_slice %0 {offsets = [2, 2, 0], sizes = [1, 1, 128], strides = [1, 1, 1]} : vector<3x3x128xf32> to vector<1x1x128xf32>
    %18 = vector.shape_cast %17 : vector<1x1x128xf32> to vector<128xf32>
    %c0_2 = arith.constant 0 : index
    %c0_3 = arith.constant 0 : index
    %c0_4 = arith.constant 0 : index
    %19 = vector.load %arg5[%c0_2, %c0_3, %c0_4] : memref<1x1x128xf32, #tpu.memory_space<vmem>>, vector<1x1x128xf32>
    %20 = vector.shape_cast %19 : vector<1x1x128xf32> to vector<128xf32>
    %c7_i32 = arith.constant 7 : i32
    %21 = arith.muli %arg2, %c7_i32 : i32
    %c0_i32 = arith.constant 0 : i32
    %22 = arith.addi %21, %c0_i32 : i32
    %c1_i32 = arith.constant 1 : i32
    %23 = arith.muli %22, %c1_i32 : i32
    %c0_i32_5 = arith.constant 0 : i32
    %24 = arith.addi %23, %c0_i32_5 : i32
    %c0_6 = arith.constant 0 : index
    %25 = arith.index_cast %24 : i32 to index
    %c0_7 = arith.constant 0 : index
    %c0_8 = arith.constant 0 : index
    %26 = vector.load %arg3[%c0_6, %25, %c0_7, %c0_8] : memref<1x16x16x128xf32, #tpu.memory_space<vmem>>, vector<1x1x16x128xf32>
    %27 = vector.shape_cast %26 : vector<1x1x16x128xf32> to vector<16x128xf32>
    %28 = vector.extract_strided_slice %27 {offsets = [0, 0], sizes = [14, 128], strides = [1, 1]} : vector<16x128xf32> to vector<14x128xf32>
    %29 = vector.shape_cast %2 : vector<128xf32> to vector<1x128xf32>
    %30 = vector.broadcast %29 : vector<1x128xf32> to vector<14x128xf32>
    %31 = arith.mulf %28, %30 : vector<14x128xf32>
    %32 = vector.extract_strided_slice %27 {offsets = [1, 0], sizes = [14, 128], strides = [1, 1]} : vector<16x128xf32> to vector<14x128xf32>
    %33 = vector.shape_cast %4 : vector<128xf32> to vector<1x128xf32>
    %34 = vector.broadcast %33 : vector<1x128xf32> to vector<14x128xf32>
    %35 = arith.mulf %32, %34 : vector<14x128xf32>
    %36 = arith.addf %31, %35 : vector<14x128xf32>
    %37 = vector.extract_strided_slice %27 {offsets = [2, 0], sizes = [14, 128], strides = [1, 1]} : vector<16x128xf32> to vector<14x128xf32>
    %38 = vector.shape_cast %6 : vector<128xf32> to vector<1x128xf32>
    %39 = vector.broadcast %38 : vector<1x128xf32> to vector<14x128xf32>
    %40 = arith.mulf %37, %39 : vector<14x128xf32>
    %41 = arith.addf %36, %40 : vector<14x128xf32>
    %c1_i32_9 = arith.constant 1 : i32
    %42 = arith.addi %23, %c1_i32_9 : i32
    %c0_10 = arith.constant 0 : index
    %43 = arith.index_cast %42 : i32 to index
    %c0_11 = arith.constant 0 : index
    %c0_12 = arith.constant 0 : index
    %44 = vector.load %arg3[%c0_10, %43, %c0_11, %c0_12] : memref<1x16x16x128xf32, #tpu.memory_space<vmem>>, vector<1x1x16x128xf32>
    %45 = vector.shape_cast %44 : vector<1x1x16x128xf32> to vector<16x128xf32>
    %46 = vector.extract_strided_slice %45 {offsets = [0, 0], sizes = [14, 128], strides = [1, 1]} : vector<16x128xf32> to vector<14x128xf32>
    %47 = vector.shape_cast %8 : vector<128xf32> to vector<1x128xf32>
    %48 = vector.broadcast %47 : vector<1x128xf32> to vector<14x128xf32>
    %49 = arith.mulf %46, %48 : vector<14x128xf32>
    %50 = arith.addf %41, %49 : vector<14x128xf32>
    %51 = vector.extract_strided_slice %45 {offsets = [1, 0], sizes = [14, 128], strides = [1, 1]} : vector<16x128xf32> to vector<14x128xf32>
    %52 = vector.shape_cast %10 : vector<128xf32> to vector<1x128xf32>
    %53 = vector.broadcast %52 : vector<1x128xf32> to vector<14x128xf32>
    %54 = arith.mulf %51, %53 : vector<14x128xf32>
    %55 = arith.addf %50, %54 : vector<14x128xf32>
    %56 = vector.extract_strided_slice %45 {offsets = [2, 0], sizes = [14, 128], strides = [1, 1]} : vector<16x128xf32> to vector<14x128xf32>
    %57 = vector.shape_cast %12 : vector<128xf32> to vector<1x128xf32>
    %58 = vector.broadcast %57 : vector<1x128xf32> to vector<14x128xf32>
    %59 = arith.mulf %56, %58 : vector<14x128xf32>
    %60 = arith.addf %55, %59 : vector<14x128xf32>
    %c2_i32 = arith.constant 2 : i32
    %61 = arith.addi %23, %c2_i32 : i32
    %c0_13 = arith.constant 0 : index
    %62 = arith.index_cast %61 : i32 to index
    %c0_14 = arith.constant 0 : index
    %c0_15 = arith.constant 0 : index
    %63 = vector.load %arg3[%c0_13, %62, %c0_14, %c0_15] : memref<1x16x16x128xf32, #tpu.memory_space<vmem>>, vector<1x1x16x128xf32>
    %64 = vector.shape_cast %63 : vector<1x1x16x128xf32> to vector<16x128xf32>
    %65 = vector.extract_strided_slice %64 {offsets = [0, 0], sizes = [14, 128], strides = [1, 1]} : vector<16x128xf32> to vector<14x128xf32>
    %66 = vector.shape_cast %14 : vector<128xf32> to vector<1x128xf32>
    %67 = vector.broadcast %66 : vector<1x128xf32> to vector<14x128xf32>
    %68 = arith.mulf %65, %67 : vector<14x128xf32>
    %69 = arith.addf %60, %68 : vector<14x128xf32>
    %70 = vector.extract_strided_slice %64 {offsets = [1, 0], sizes = [14, 128], strides = [1, 1]} : vector<16x128xf32> to vector<14x128xf32>
    %71 = vector.shape_cast %16 : vector<128xf32> to vector<1x128xf32>
    %72 = vector.broadcast %71 : vector<1x128xf32> to vector<14x128xf32>
    %73 = arith.mulf %70, %72 : vector<14x128xf32>
    %74 = arith.addf %69, %73 : vector<14x128xf32>
    %75 = vector.extract_strided_slice %64 {offsets = [2, 0], sizes = [14, 128], strides = [1, 1]} : vector<16x128xf32> to vector<14x128xf32>
    %76 = vector.shape_cast %18 : vector<128xf32> to vector<1x128xf32>
    %77 = vector.broadcast %76 : vector<1x128xf32> to vector<14x128xf32>
    %78 = arith.mulf %75, %77 : vector<14x128xf32>
    %79 = arith.addf %74, %78 : vector<14x128xf32>
    %80 = vector.shape_cast %20 : vector<128xf32> to vector<1x128xf32>
    %81 = vector.broadcast %80 : vector<1x128xf32> to vector<14x128xf32>
    %82 = arith.addf %79, %81 : vector<14x128xf32>
    %cst = arith.constant 0.000000e+00 : f32
    %83 = vector.broadcast %cst : f32 to vector<14x128xf32>
    %84 = arith.maximumf %82, %83 : vector<14x128xf32>
    %c0_16 = arith.constant 0 : index
    %c0_17 = arith.constant 0 : index
    %c0_18 = arith.constant 0 : index
    %c0_19 = arith.constant 0 : index
    %85 = vector.load %arg6[%c0_16, %c0_17, %c0_18, %c0_19] : memref<1x7x14x128xf32, #tpu.memory_space<vmem>>, vector<1x1x14x128xf32>
    %86 = vector.shape_cast %85 : vector<1x1x14x128xf32> to vector<14x128xf32>
    %87 = vector.shape_cast %84 : vector<14x128xf32> to vector<1x1x14x128xf32>
    tpu.vector_store %arg6[%c0_16, %c0_17, %c0_18, %c0_19], %87 {strides = array<i32>} : memref<1x7x14x128xf32, #tpu.memory_space<vmem>>, vector<1x1x14x128xf32>,
    %c1_i32_20 = arith.constant 1 : i32
    %88 = arith.addi %21, %c1_i32_20 : i32
    %c1_i32_21 = arith.constant 1 : i32
    %89 = arith.muli %88, %c1_i32_21 : i32
    %c0_i32_22 = arith.constant 0 : i32
    %90 = arith.addi %89, %c0_i32_22 : i32
    %c0_23 = arith.constant 0 : index
    %91 = arith.index_cast %90 : i32 to index
    %c0_24 = arith.constant 0 : index
    %c0_25 = arith.constant 0 : index
    %92 = vector.load %arg3[%c0_23, %91, %c0_24, %c0_25] : memref<1x16x16x128xf32, #tpu.memory_space<vmem>>, vector<1x1x16x128xf32>
    %93 = vector.shape_cast %92 : vector<1x1x16x128xf32> to vector<16x128xf32>
    %94 = vector.extract_strided_slice %93 {offsets = [0, 0], sizes = [14, 128], strides = [1, 1]} : vector<16x128xf32> to vector<14x128xf32>
    %95 = vector.shape_cast %2 : vector<128xf32> to vector<1x128xf32>
    %96 = vector.broadcast %95 : vector<1x128xf32> to vector<14x128xf32>
    %97 = arith.mulf %94, %96 : vector<14x128xf32>
    %98 = vector.extract_strided_slice %93 {offsets = [1, 0], sizes = [14, 128], strides = [1, 1]} : vector<16x128xf32> to vector<14x128xf32>
    %99 = vector.shape_cast %4 : vector<128xf32> to vector<1x128xf32>
    %100 = vector.broadcast %99 : vector<1x128xf32> to vector<14x128xf32>
    %101 = arith.mulf %98, %100 : vector<14x128xf32>
    %102 = arith.addf %97, %101 : vector<14x128xf32>
    %103 = vector.extract_strided_slice %93 {offsets = [2, 0], sizes = [14, 128], strides = [1, 1]} : vector<16x128xf32> to vector<14x128xf32>
    %104 = vector.shape_cast %6 : vector<128xf32> to vector<1x128xf32>
    %105 = vector.broadcast %104 : vector<1x128xf32> to vector<14x128xf32>
    %106 = arith.mulf %103, %105 : vector<14x128xf32>
    %107 = arith.addf %102, %106 : vector<14x128xf32>
    %c1_i32_26 = arith.constant 1 : i32
    %108 = arith.addi %89, %c1_i32_26 : i32
    %c0_27 = arith.constant 0 : index
    %109 = arith.index_cast %108 : i32 to index
    %c0_28 = arith.constant 0 : index
    %c0_29 = arith.constant 0 : index
    %110 = vector.load %arg3[%c0_27, %109, %c0_28, %c0_29] : memref<1x16x16x128xf32, #tpu.memory_space<vmem>>, vector<1x1x16x128xf32>
    %111 = vector.shape_cast %110 : vector<1x1x16x128xf32> to vector<16x128xf32>
    %112 = vector.extract_strided_slice %111 {offsets = [0, 0], sizes = [14, 128], strides = [1, 1]} : vector<16x128xf32> to vector<14x128xf32>
    %113 = vector.shape_cast %8 : vector<128xf32> to vector<1x128xf32>
    %114 = vector.broadcast %113 : vector<1x128xf32> to vector<14x128xf32>
    %115 = arith.mulf %112, %114 : vector<14x128xf32>
    %116 = arith.addf %107, %115 : vector<14x128xf32>
    %117 = vector.extract_strided_slice %111 {offsets = [1, 0], sizes = [14, 128], strides = [1, 1]} : vector<16x128xf32> to vector<14x128xf32>
    %118 = vector.shape_cast %10 : vector<128xf32> to vector<1x128xf32>
    %119 = vector.broadcast %118 : vector<1x128xf32> to vector<14x128xf32>
    %120 = arith.mulf %117, %119 : vector<14x128xf32>
    %121 = arith.addf %116, %120 : vector<14x128xf32>
    %122 = vector.extract_strided_slice %111 {offsets = [2, 0], sizes = [14, 128], strides = [1, 1]} : vector<16x128xf32> to vector<14x128xf32>
    %123 = vector.shape_cast %12 : vector<128xf32> to vector<1x128xf32>
    %124 = vector.broadcast %123 : vector<1x128xf32> to vector<14x128xf32>
    %125 = arith.mulf %122, %124 : vector<14x128xf32>
    %126 = arith.addf %121, %125 : vector<14x128xf32>
    %c2_i32_30 = arith.constant 2 : i32
    %127 = arith.addi %89, %c2_i32_30 : i32
    %c0_31 = arith.constant 0 : index
    %128 = arith.index_cast %127 : i32 to index
    %c0_32 = arith.constant 0 : index
    %c0_33 = arith.constant 0 : index
    %129 = vector.load %arg3[%c0_31, %128, %c0_32, %c0_33] : memref<1x16x16x128xf32, #tpu.memory_space<vmem>>, vector<1x1x16x128xf32>
    %130 = vector.shape_cast %129 : vector<1x1x16x128xf32> to vector<16x128xf32>
    %131 = vector.extract_strided_slice %130 {offsets = [0, 0], sizes = [14, 128], strides = [1, 1]} : vector<16x128xf32> to vector<14x128xf32>
    %132 = vector.shape_cast %14 : vector<128xf32> to vector<1x128xf32>
    %133 = vector.broadcast %132 : vector<1x128xf32> to vector<14x128xf32>
    %134 = arith.mulf %131, %133 : vector<14x128xf32>
    %135 = arith.addf %126, %134 : vector<14x128xf32>
    %136 = vector.extract_strided_slice %130 {offsets = [1, 0], sizes = [14, 128], strides = [1, 1]} : vector<16x128xf32> to vector<14x128xf32>
    %137 = vector.shape_cast %16 : vector<128xf32> to vector<1x128xf32>
    %138 = vector.broadcast %137 : vector<1x128xf32> to vector<14x128xf32>
    %139 = arith.mulf %136, %138 : vector<14x128xf32>
    %140 = arith.addf %135, %139 : vector<14x128xf32>
    %141 = vector.extract_strided_slice %130 {offsets = [2, 0], sizes = [14, 128], strides = [1, 1]} : vector<16x128xf32> to vector<14x128xf32>
    %142 = vector.shape_cast %18 : vector<128xf32> to vector<1x128xf32>
    %143 = vector.broadcast %142 : vector<1x128xf32> to vector<14x128xf32>
    %144 = arith.mulf %141, %143 : vector<14x128xf32>
    %145 = arith.addf %140, %144 : vector<14x128xf32>
    %146 = vector.shape_cast %20 : vector<128xf32> to vector<1x128xf32>
    %147 = vector.broadcast %146 : vector<1x128xf32> to vector<14x128xf32>
    %148 = arith.addf %145, %147 : vector<14x128xf32>
    %cst_34 = arith.constant 0.000000e+00 : f32
    %149 = vector.broadcast %cst_34 : f32 to vector<14x128xf32>
    %150 = arith.maximumf %148, %149 : vector<14x128xf32>
    %c0_35 = arith.constant 0 : index
    %c1 = arith.constant 1 : index
    %c0_36 = arith.constant 0 : index
    %c0_37 = arith.constant 0 : index
    %151 = vector.load %arg6[%c0_35, %c1, %c0_36, %c0_37] : memref<1x7x14x128xf32, #tpu.memory_space<vmem>>, vector<1x1x14x128xf32>
    %152 = vector.shape_cast %151 : vector<1x1x14x128xf32> to vector<14x128xf32>
    %153 = vector.shape_cast %150 : vector<14x128xf32> to vector<1x1x14x128xf32>
    tpu.vector_store %arg6[%c0_35, %c1, %c0_36, %c0_37], %153 {strides = array<i32>} : memref<1x7x14x128xf32, #tpu.memory_space<vmem>>, vector<1x1x14x128xf32>,
    %c2_i32_38 = arith.constant 2 : i32
    %154 = arith.addi %21, %c2_i32_38 : i32
    %c1_i32_39 = arith.constant 1 : i32
    %155 = arith.muli %154, %c1_i32_39 : i32
    %c0_i32_40 = arith.constant 0 : i32
    %156 = arith.addi %155, %c0_i32_40 : i32
    %c0_41 = arith.constant 0 : index
    %157 = arith.index_cast %156 : i32 to index
    %c0_42 = arith.constant 0 : index
    %c0_43 = arith.constant 0 : index
    %158 = vector.load %arg3[%c0_41, %157, %c0_42, %c0_43] : memref<1x16x16x128xf32, #tpu.memory_space<vmem>>, vector<1x1x16x128xf32>
    %159 = vector.shape_cast %158 : vector<1x1x16x128xf32> to vector<16x128xf32>
    %160 = vector.extract_strided_slice %159 {offsets = [0, 0], sizes = [14, 128], strides = [1, 1]} : vector<16x128xf32> to vector<14x128xf32>
    %161 = vector.shape_cast %2 : vector<128xf32> to vector<1x128xf32>
    %162 = vector.broadcast %161 : vector<1x128xf32> to vector<14x128xf32>
    %163 = arith.mulf %160, %162 : vector<14x128xf32>
    %164 = vector.extract_strided_slice %159 {offsets = [1, 0], sizes = [14, 128], strides = [1, 1]} : vector<16x128xf32> to vector<14x128xf32>
    %165 = vector.shape_cast %4 : vector<128xf32> to vector<1x128xf32>
    %166 = vector.broadcast %165 : vector<1x128xf32> to vector<14x128xf32>
    %167 = arith.mulf %164, %166 : vector<14x128xf32>
    %168 = arith.addf %163, %167 : vector<14x128xf32>
    %169 = vector.extract_strided_slice %159 {offsets = [2, 0], sizes = [14, 128], strides = [1, 1]} : vector<16x128xf32> to vector<14x128xf32>
    %170 = vector.shape_cast %6 : vector<128xf32> to vector<1x128xf32>
    %171 = vector.broadcast %170 : vector<1x128xf32> to vector<14x128xf32>
    %172 = arith.mulf %169, %171 : vector<14x128xf32>
    %173 = arith.addf %168, %172 : vector<14x128xf32>
    %c1_i32_44 = arith.constant 1 : i32
    %174 = arith.addi %155, %c1_i32_44 : i32
    %c0_45 = arith.constant 0 : index
    %175 = arith.index_cast %174 : i32 to index
    %c0_46 = arith.constant 0 : index
    %c0_47 = arith.constant 0 : index
    %176 = vector.load %arg3[%c0_45, %175, %c0_46, %c0_47] : memref<1x16x16x128xf32, #tpu.memory_space<vmem>>, vector<1x1x16x128xf32>
    %177 = vector.shape_cast %176 : vector<1x1x16x128xf32> to vector<16x128xf32>
    %178 = vector.extract_strided_slice %177 {offsets = [0, 0], sizes = [14, 128], strides = [1, 1]} : vector<16x128xf32> to vector<14x128xf32>
    %179 = vector.shape_cast %8 : vector<128xf32> to vector<1x128xf32>
    %180 = vector.broadcast %179 : vector<1x128xf32> to vector<14x128xf32>
    %181 = arith.mulf %178, %180 : vector<14x128xf32>
    %182 = arith.addf %173, %181 : vector<14x128xf32>
    %183 = vector.extract_strided_slice %177 {offsets = [1, 0], sizes = [14, 128], strides = [1, 1]} : vector<16x128xf32> to vector<14x128xf32>
    %184 = vector.shape_cast %10 : vector<128xf32> to vector<1x128xf32>
    %185 = vector.broadcast %184 : vector<1x128xf32> to vector<14x128xf32>
    %186 = arith.mulf %183, %185 : vector<14x128xf32>
    %187 = arith.addf %182, %186 : vector<14x128xf32>
    %188 = vector.extract_strided_slice %177 {offsets = [2, 0], sizes = [14, 128], strides = [1, 1]} : vector<16x128xf32> to vector<14x128xf32>
    %189 = vector.shape_cast %12 : vector<128xf32> to vector<1x128xf32>
    %190 = vector.broadcast %189 : vector<1x128xf32> to vector<14x128xf32>
    %191 = arith.mulf %188, %190 : vector<14x128xf32>
    %192 = arith.addf %187, %191 : vector<14x128xf32>
    %c2_i32_48 = arith.constant 2 : i32
    %193 = arith.addi %155, %c2_i32_48 : i32
    %c0_49 = arith.constant 0 : index
    %194 = arith.index_cast %193 : i32 to index
    %c0_50 = arith.constant 0 : index
    %c0_51 = arith.constant 0 : index
    %195 = vector.load %arg3[%c0_49, %194, %c0_50, %c0_51] : memref<1x16x16x128xf32, #tpu.memory_space<vmem>>, vector<1x1x16x128xf32>
    %196 = vector.shape_cast %195 : vector<1x1x16x128xf32> to vector<16x128xf32>
    %197 = vector.extract_strided_slice %196 {offsets = [0, 0], sizes = [14, 128], strides = [1, 1]} : vector<16x128xf32> to vector<14x128xf32>
    %198 = vector.shape_cast %14 : vector<128xf32> to vector<1x128xf32>
    %199 = vector.broadcast %198 : vector<1x128xf32> to vector<14x128xf32>
    %200 = arith.mulf %197, %199 : vector<14x128xf32>
    %201 = arith.addf %192, %200 : vector<14x128xf32>
    %202 = vector.extract_strided_slice %196 {offsets = [1, 0], sizes = [14, 128], strides = [1, 1]} : vector<16x128xf32> to vector<14x128xf32>
    %203 = vector.shape_cast %16 : vector<128xf32> to vector<1x128xf32>
    %204 = vector.broadcast %203 : vector<1x128xf32> to vector<14x128xf32>
    %205 = arith.mulf %202, %204 : vector<14x128xf32>
    %206 = arith.addf %201, %205 : vector<14x128xf32>
    %207 = vector.extract_strided_slice %196 {offsets = [2, 0], sizes = [14, 128], strides = [1, 1]} : vector<16x128xf32> to vector<14x128xf32>
    %208 = vector.shape_cast %18 : vector<128xf32> to vector<1x128xf32>
    %209 = vector.broadcast %208 : vector<1x128xf32> to vector<14x128xf32>
    %210 = arith.mulf %207, %209 : vector<14x128xf32>
    %211 = arith.addf %206, %210 : vector<14x128xf32>
    %212 = vector.shape_cast %20 : vector<128xf32> to vector<1x128xf32>
    %213 = vector.broadcast %212 : vector<1x128xf32> to vector<14x128xf32>
    %214 = arith.addf %211, %213 : vector<14x128xf32>
    %cst_52 = arith.constant 0.000000e+00 : f32
    %215 = vector.broadcast %cst_52 : f32 to vector<14x128xf32>
    %216 = arith.maximumf %214, %215 : vector<14x128xf32>
    %c0_53 = arith.constant 0 : index
    %c2 = arith.constant 2 : index
    %c0_54 = arith.constant 0 : index
    %c0_55 = arith.constant 0 : index
    %217 = vector.load %arg6[%c0_53, %c2, %c0_54, %c0_55] : memref<1x7x14x128xf32, #tpu.memory_space<vmem>>, vector<1x1x14x128xf32>
    %218 = vector.shape_cast %217 : vector<1x1x14x128xf32> to vector<14x128xf32>
    %219 = vector.shape_cast %216 : vector<14x128xf32> to vector<1x1x14x128xf32>
    tpu.vector_store %arg6[%c0_53, %c2, %c0_54, %c0_55], %219 {strides = array<i32>} : memref<1x7x14x128xf32, #tpu.memory_space<vmem>>, vector<1x1x14x128xf32>,
    %c3_i32 = arith.constant 3 : i32
    %220 = arith.addi %21, %c3_i32 : i32
    %c1_i32_56 = arith.constant 1 : i32
    %221 = arith.muli %220, %c1_i32_56 : i32
    %c0_i32_57 = arith.constant 0 : i32
    %222 = arith.addi %221, %c0_i32_57 : i32
    %c0_58 = arith.constant 0 : index
    %223 = arith.index_cast %222 : i32 to index
    %c0_59 = arith.constant 0 : index
    %c0_60 = arith.constant 0 : index
    %224 = vector.load %arg3[%c0_58, %223, %c0_59, %c0_60] : memref<1x16x16x128xf32, #tpu.memory_space<vmem>>, vector<1x1x16x128xf32>
    %225 = vector.shape_cast %224 : vector<1x1x16x128xf32> to vector<16x128xf32>
    %226 = vector.extract_strided_slice %225 {offsets = [0, 0], sizes = [14, 128], strides = [1, 1]} : vector<16x128xf32> to vector<14x128xf32>
    %227 = vector.shape_cast %2 : vector<128xf32> to vector<1x128xf32>
    %228 = vector.broadcast %227 : vector<1x128xf32> to vector<14x128xf32>
    %229 = arith.mulf %226, %228 : vector<14x128xf32>
    %230 = vector.extract_strided_slice %225 {offsets = [1, 0], sizes = [14, 128], strides = [1, 1]} : vector<16x128xf32> to vector<14x128xf32>
    %231 = vector.shape_cast %4 : vector<128xf32> to vector<1x128xf32>
    %232 = vector.broadcast %231 : vector<1x128xf32> to vector<14x128xf32>
    %233 = arith.mulf %230, %232 : vector<14x128xf32>
    %234 = arith.addf %229, %233 : vector<14x128xf32>
    %235 = vector.extract_strided_slice %225 {offsets = [2, 0], sizes = [14, 128], strides = [1, 1]} : vector<16x128xf32> to vector<14x128xf32>
    %236 = vector.shape_cast %6 : vector<128xf32> to vector<1x128xf32>
    %237 = vector.broadcast %236 : vector<1x128xf32> to vector<14x128xf32>
    %238 = arith.mulf %235, %237 : vector<14x128xf32>
    %239 = arith.addf %234, %238 : vector<14x128xf32>
    %c1_i32_61 = arith.constant 1 : i32
    %240 = arith.addi %221, %c1_i32_61 : i32
    %c0_62 = arith.constant 0 : index
    %241 = arith.index_cast %240 : i32 to index
    %c0_63 = arith.constant 0 : index
    %c0_64 = arith.constant 0 : index
    %242 = vector.load %arg3[%c0_62, %241, %c0_63, %c0_64] : memref<1x16x16x128xf32, #tpu.memory_space<vmem>>, vector<1x1x16x128xf32>
    %243 = vector.shape_cast %242 : vector<1x1x16x128xf32> to vector<16x128xf32>
    %244 = vector.extract_strided_slice %243 {offsets = [0, 0], sizes = [14, 128], strides = [1, 1]} : vector<16x128xf32> to vector<14x128xf32>
    %245 = vector.shape_cast %8 : vector<128xf32> to vector<1x128xf32>
    %246 = vector.broadcast %245 : vector<1x128xf32> to vector<14x128xf32>
    %247 = arith.mulf %244, %246 : vector<14x128xf32>
    %248 = arith.addf %239, %247 : vector<14x128xf32>
    %249 = vector.extract_strided_slice %243 {offsets = [1, 0], sizes = [14, 128], strides = [1, 1]} : vector<16x128xf32> to vector<14x128xf32>
    %250 = vector.shape_cast %10 : vector<128xf32> to vector<1x128xf32>
    %251 = vector.broadcast %250 : vector<1x128xf32> to vector<14x128xf32>
    %252 = arith.mulf %249, %251 : vector<14x128xf32>
    %253 = arith.addf %248, %252 : vector<14x128xf32>
    %254 = vector.extract_strided_slice %243 {offsets = [2, 0], sizes = [14, 128], strides = [1, 1]} : vector<16x128xf32> to vector<14x128xf32>
    %255 = vector.shape_cast %12 : vector<128xf32> to vector<1x128xf32>
    %256 = vector.broadcast %255 : vector<1x128xf32> to vector<14x128xf32>
    %257 = arith.mulf %254, %256 : vector<14x128xf32>
    %258 = arith.addf %253, %257 : vector<14x128xf32>
    %c2_i32_65 = arith.constant 2 : i32
    %259 = arith.addi %221, %c2_i32_65 : i32
    %c0_66 = arith.constant 0 : index
    %260 = arith.index_cast %259 : i32 to index
    %c0_67 = arith.constant 0 : index
    %c0_68 = arith.constant 0 : index
    %261 = vector.load %arg3[%c0_66, %260, %c0_67, %c0_68] : memref<1x16x16x128xf32, #tpu.memory_space<vmem>>, vector<1x1x16x128xf32>
    %262 = vector.shape_cast %261 : vector<1x1x16x128xf32> to vector<16x128xf32>
    %263 = vector.extract_strided_slice %262 {offsets = [0, 0], sizes = [14, 128], strides = [1, 1]} : vector<16x128xf32> to vector<14x128xf32>
    %264 = vector.shape_cast %14 : vector<128xf32> to vector<1x128xf32>
    %265 = vector.broadcast %264 : vector<1x128xf32> to vector<14x128xf32>
    %266 = arith.mulf %263, %265 : vector<14x128xf32>
    %267 = arith.addf %258, %266 : vector<14x128xf32>
    %268 = vector.extract_strided_slice %262 {offsets = [1, 0], sizes = [14, 128], strides = [1, 1]} : vector<16x128xf32> to vector<14x128xf32>
    %269 = vector.shape_cast %16 : vector<128xf32> to vector<1x128xf32>
    %270 = vector.broadcast %269 : vector<1x128xf32> to vector<14x128xf32>
    %271 = arith.mulf %268, %270 : vector<14x128xf32>
    %272 = arith.addf %267, %271 : vector<14x128xf32>
    %273 = vector.extract_strided_slice %262 {offsets = [2, 0], sizes = [14, 128], strides = [1, 1]} : vector<16x128xf32> to vector<14x128xf32>
    %274 = vector.shape_cast %18 : vector<128xf32> to vector<1x128xf32>
    %275 = vector.broadcast %274 : vector<1x128xf32> to vector<14x128xf32>
    %276 = arith.mulf %273, %275 : vector<14x128xf32>
    %277 = arith.addf %272, %276 : vector<14x128xf32>
    %278 = vector.shape_cast %20 : vector<128xf32> to vector<1x128xf32>
    %279 = vector.broadcast %278 : vector<1x128xf32> to vector<14x128xf32>
    %280 = arith.addf %277, %279 : vector<14x128xf32>
    %cst_69 = arith.constant 0.000000e+00 : f32
    %281 = vector.broadcast %cst_69 : f32 to vector<14x128xf32>
    %282 = arith.maximumf %280, %281 : vector<14x128xf32>
    %c0_70 = arith.constant 0 : index
    %c3 = arith.constant 3 : index
    %c0_71 = arith.constant 0 : index
    %c0_72 = arith.constant 0 : index
    %283 = vector.load %arg6[%c0_70, %c3, %c0_71, %c0_72] : memref<1x7x14x128xf32, #tpu.memory_space<vmem>>, vector<1x1x14x128xf32>
    %284 = vector.shape_cast %283 : vector<1x1x14x128xf32> to vector<14x128xf32>
    %285 = vector.shape_cast %282 : vector<14x128xf32> to vector<1x1x14x128xf32>
    tpu.vector_store %arg6[%c0_70, %c3, %c0_71, %c0_72], %285 {strides = array<i32>} : memref<1x7x14x128xf32, #tpu.memory_space<vmem>>, vector<1x1x14x128xf32>,
    %c4_i32 = arith.constant 4 : i32
    %286 = arith.addi %21, %c4_i32 : i32
    %c1_i32_73 = arith.constant 1 : i32
    %287 = arith.muli %286, %c1_i32_73 : i32
    %c0_i32_74 = arith.constant 0 : i32
    %288 = arith.addi %287, %c0_i32_74 : i32
    %c0_75 = arith.constant 0 : index
    %289 = arith.index_cast %288 : i32 to index
    %c0_76 = arith.constant 0 : index
    %c0_77 = arith.constant 0 : index
    %290 = vector.load %arg3[%c0_75, %289, %c0_76, %c0_77] : memref<1x16x16x128xf32, #tpu.memory_space<vmem>>, vector<1x1x16x128xf32>
    %291 = vector.shape_cast %290 : vector<1x1x16x128xf32> to vector<16x128xf32>
    %292 = vector.extract_strided_slice %291 {offsets = [0, 0], sizes = [14, 128], strides = [1, 1]} : vector<16x128xf32> to vector<14x128xf32>
    %293 = vector.shape_cast %2 : vector<128xf32> to vector<1x128xf32>
    %294 = vector.broadcast %293 : vector<1x128xf32> to vector<14x128xf32>
    %295 = arith.mulf %292, %294 : vector<14x128xf32>
    %296 = vector.extract_strided_slice %291 {offsets = [1, 0], sizes = [14, 128], strides = [1, 1]} : vector<16x128xf32> to vector<14x128xf32>
    %297 = vector.shape_cast %4 : vector<128xf32> to vector<1x128xf32>
    %298 = vector.broadcast %297 : vector<1x128xf32> to vector<14x128xf32>
    %299 = arith.mulf %296, %298 : vector<14x128xf32>
    %300 = arith.addf %295, %299 : vector<14x128xf32>
    %301 = vector.extract_strided_slice %291 {offsets = [2, 0], sizes = [14, 128], strides = [1, 1]} : vector<16x128xf32> to vector<14x128xf32>
    %302 = vector.shape_cast %6 : vector<128xf32> to vector<1x128xf32>
    %303 = vector.broadcast %302 : vector<1x128xf32> to vector<14x128xf32>
    %304 = arith.mulf %301, %303 : vector<14x128xf32>
    %305 = arith.addf %300, %304 : vector<14x128xf32>
    %c1_i32_78 = arith.constant 1 : i32
    %306 = arith.addi %287, %c1_i32_78 : i32
    %c0_79 = arith.constant 0 : index
    %307 = arith.index_cast %306 : i32 to index
    %c0_80 = arith.constant 0 : index
    %c0_81 = arith.constant 0 : index
    %308 = vector.load %arg3[%c0_79, %307, %c0_80, %c0_81] : memref<1x16x16x128xf32, #tpu.memory_space<vmem>>, vector<1x1x16x128xf32>
    %309 = vector.shape_cast %308 : vector<1x1x16x128xf32> to vector<16x128xf32>
    %310 = vector.extract_strided_slice %309 {offsets = [0, 0], sizes = [14, 128], strides = [1, 1]} : vector<16x128xf32> to vector<14x128xf32>
    %311 = vector.shape_cast %8 : vector<128xf32> to vector<1x128xf32>
    %312 = vector.broadcast %311 : vector<1x128xf32> to vector<14x128xf32>
    %313 = arith.mulf %310, %312 : vector<14x128xf32>
    %314 = arith.addf %305, %313 : vector<14x128xf32>
    %315 = vector.extract_strided_slice %309 {offsets = [1, 0], sizes = [14, 128], strides = [1, 1]} : vector<16x128xf32> to vector<14x128xf32>
    %316 = vector.shape_cast %10 : vector<128xf32> to vector<1x128xf32>
    %317 = vector.broadcast %316 : vector<1x128xf32> to vector<14x128xf32>
    %318 = arith.mulf %315, %317 : vector<14x128xf32>
    %319 = arith.addf %314, %318 : vector<14x128xf32>
    %320 = vector.extract_strided_slice %309 {offsets = [2, 0], sizes = [14, 128], strides = [1, 1]} : vector<16x128xf32> to vector<14x128xf32>
    %321 = vector.shape_cast %12 : vector<128xf32> to vector<1x128xf32>
    %322 = vector.broadcast %321 : vector<1x128xf32> to vector<14x128xf32>
    %323 = arith.mulf %320, %322 : vector<14x128xf32>
    %324 = arith.addf %319, %323 : vector<14x128xf32>
    %c2_i32_82 = arith.constant 2 : i32
    %325 = arith.addi %287, %c2_i32_82 : i32
    %c0_83 = arith.constant 0 : index
    %326 = arith.index_cast %325 : i32 to index
    %c0_84 = arith.constant 0 : index
    %c0_85 = arith.constant 0 : index
    %327 = vector.load %arg3[%c0_83, %326, %c0_84, %c0_85] : memref<1x16x16x128xf32, #tpu.memory_space<vmem>>, vector<1x1x16x128xf32>
    %328 = vector.shape_cast %327 : vector<1x1x16x128xf32> to vector<16x128xf32>
    %329 = vector.extract_strided_slice %328 {offsets = [0, 0], sizes = [14, 128], strides = [1, 1]} : vector<16x128xf32> to vector<14x128xf32>
    %330 = vector.shape_cast %14 : vector<128xf32> to vector<1x128xf32>
    %331 = vector.broadcast %330 : vector<1x128xf32> to vector<14x128xf32>
    %332 = arith.mulf %329, %331 : vector<14x128xf32>
    %333 = arith.addf %324, %332 : vector<14x128xf32>
    %334 = vector.extract_strided_slice %328 {offsets = [1, 0], sizes = [14, 128], strides = [1, 1]} : vector<16x128xf32> to vector<14x128xf32>
    %335 = vector.shape_cast %16 : vector<128xf32> to vector<1x128xf32>
    %336 = vector.broadcast %335 : vector<1x128xf32> to vector<14x128xf32>
    %337 = arith.mulf %334, %336 : vector<14x128xf32>
    %338 = arith.addf %333, %337 : vector<14x128xf32>
    %339 = vector.extract_strided_slice %328 {offsets = [2, 0], sizes = [14, 128], strides = [1, 1]} : vector<16x128xf32> to vector<14x128xf32>
    %340 = vector.shape_cast %18 : vector<128xf32> to vector<1x128xf32>
    %341 = vector.broadcast %340 : vector<1x128xf32> to vector<14x128xf32>
    %342 = arith.mulf %339, %341 : vector<14x128xf32>
    %343 = arith.addf %338, %342 : vector<14x128xf32>
    %344 = vector.shape_cast %20 : vector<128xf32> to vector<1x128xf32>
    %345 = vector.broadcast %344 : vector<1x128xf32> to vector<14x128xf32>
    %346 = arith.addf %343, %345 : vector<14x128xf32>
    %cst_86 = arith.constant 0.000000e+00 : f32
    %347 = vector.broadcast %cst_86 : f32 to vector<14x128xf32>
    %348 = arith.maximumf %346, %347 : vector<14x128xf32>
    %c0_87 = arith.constant 0 : index
    %c4 = arith.constant 4 : index
    %c0_88 = arith.constant 0 : index
    %c0_89 = arith.constant 0 : index
    %349 = vector.load %arg6[%c0_87, %c4, %c0_88, %c0_89] : memref<1x7x14x128xf32, #tpu.memory_space<vmem>>, vector<1x1x14x128xf32>
    %350 = vector.shape_cast %349 : vector<1x1x14x128xf32> to vector<14x128xf32>
    %351 = vector.shape_cast %348 : vector<14x128xf32> to vector<1x1x14x128xf32>
    tpu.vector_store %arg6[%c0_87, %c4, %c0_88, %c0_89], %351 {strides = array<i32>} : memref<1x7x14x128xf32, #tpu.memory_space<vmem>>, vector<1x1x14x128xf32>,
    %c5_i32 = arith.constant 5 : i32
    %352 = arith.addi %21, %c5_i32 : i32
    %c1_i32_90 = arith.constant 1 : i32
    %353 = arith.muli %352, %c1_i32_90 : i32
    %c0_i32_91 = arith.constant 0 : i32
    %354 = arith.addi %353, %c0_i32_91 : i32
    %c0_92 = arith.constant 0 : index
    %355 = arith.index_cast %354 : i32 to index
    %c0_93 = arith.constant 0 : index
    %c0_94 = arith.constant 0 : index
    %356 = vector.load %arg3[%c0_92, %355, %c0_93, %c0_94] : memref<1x16x16x128xf32, #tpu.memory_space<vmem>>, vector<1x1x16x128xf32>
    %357 = vector.shape_cast %356 : vector<1x1x16x128xf32> to vector<16x128xf32>
    %358 = vector.extract_strided_slice %357 {offsets = [0, 0], sizes = [14, 128], strides = [1, 1]} : vector<16x128xf32> to vector<14x128xf32>
    %359 = vector.shape_cast %2 : vector<128xf32> to vector<1x128xf32>
    %360 = vector.broadcast %359 : vector<1x128xf32> to vector<14x128xf32>
    %361 = arith.mulf %358, %360 : vector<14x128xf32>
    %362 = vector.extract_strided_slice %357 {offsets = [1, 0], sizes = [14, 128], strides = [1, 1]} : vector<16x128xf32> to vector<14x128xf32>
    %363 = vector.shape_cast %4 : vector<128xf32> to vector<1x128xf32>
    %364 = vector.broadcast %363 : vector<1x128xf32> to vector<14x128xf32>
    %365 = arith.mulf %362, %364 : vector<14x128xf32>
    %366 = arith.addf %361, %365 : vector<14x128xf32>
    %367 = vector.extract_strided_slice %357 {offsets = [2, 0], sizes = [14, 128], strides = [1, 1]} : vector<16x128xf32> to vector<14x128xf32>
    %368 = vector.shape_cast %6 : vector<128xf32> to vector<1x128xf32>
    %369 = vector.broadcast %368 : vector<1x128xf32> to vector<14x128xf32>
    %370 = arith.mulf %367, %369 : vector<14x128xf32>
    %371 = arith.addf %366, %370 : vector<14x128xf32>
    %c1_i32_95 = arith.constant 1 : i32
    %372 = arith.addi %353, %c1_i32_95 : i32
    %c0_96 = arith.constant 0 : index
    %373 = arith.index_cast %372 : i32 to index
    %c0_97 = arith.constant 0 : index
    %c0_98 = arith.constant 0 : index
    %374 = vector.load %arg3[%c0_96, %373, %c0_97, %c0_98] : memref<1x16x16x128xf32, #tpu.memory_space<vmem>>, vector<1x1x16x128xf32>
    %375 = vector.shape_cast %374 : vector<1x1x16x128xf32> to vector<16x128xf32>
    %376 = vector.extract_strided_slice %375 {offsets = [0, 0], sizes = [14, 128], strides = [1, 1]} : vector<16x128xf32> to vector<14x128xf32>
    %377 = vector.shape_cast %8 : vector<128xf32> to vector<1x128xf32>
    %378 = vector.broadcast %377 : vector<1x128xf32> to vector<14x128xf32>
    %379 = arith.mulf %376, %378 : vector<14x128xf32>
    %380 = arith.addf %371, %379 : vector<14x128xf32>
    %381 = vector.extract_strided_slice %375 {offsets = [1, 0], sizes = [14, 128], strides = [1, 1]} : vector<16x128xf32> to vector<14x128xf32>
    %382 = vector.shape_cast %10 : vector<128xf32> to vector<1x128xf32>
    %383 = vector.broadcast %382 : vector<1x128xf32> to vector<14x128xf32>
    %384 = arith.mulf %381, %383 : vector<14x128xf32>
    %385 = arith.addf %380, %384 : vector<14x128xf32>
    %386 = vector.extract_strided_slice %375 {offsets = [2, 0], sizes = [14, 128], strides = [1, 1]} : vector<16x128xf32> to vector<14x128xf32>
    %387 = vector.shape_cast %12 : vector<128xf32> to vector<1x128xf32>
    %388 = vector.broadcast %387 : vector<1x128xf32> to vector<14x128xf32>
    %389 = arith.mulf %386, %388 : vector<14x128xf32>
    %390 = arith.addf %385, %389 : vector<14x128xf32>
    %c2_i32_99 = arith.constant 2 : i32
    %391 = arith.addi %353, %c2_i32_99 : i32
    %c0_100 = arith.constant 0 : index
    %392 = arith.index_cast %391 : i32 to index
    %c0_101 = arith.constant 0 : index
    %c0_102 = arith.constant 0 : index
    %393 = vector.load %arg3[%c0_100, %392, %c0_101, %c0_102] : memref<1x16x16x128xf32, #tpu.memory_space<vmem>>, vector<1x1x16x128xf32>
    %394 = vector.shape_cast %393 : vector<1x1x16x128xf32> to vector<16x128xf32>
    %395 = vector.extract_strided_slice %394 {offsets = [0, 0], sizes = [14, 128], strides = [1, 1]} : vector<16x128xf32> to vector<14x128xf32>
    %396 = vector.shape_cast %14 : vector<128xf32> to vector<1x128xf32>
    %397 = vector.broadcast %396 : vector<1x128xf32> to vector<14x128xf32>
    %398 = arith.mulf %395, %397 : vector<14x128xf32>
    %399 = arith.addf %390, %398 : vector<14x128xf32>
    %400 = vector.extract_strided_slice %394 {offsets = [1, 0], sizes = [14, 128], strides = [1, 1]} : vector<16x128xf32> to vector<14x128xf32>
    %401 = vector.shape_cast %16 : vector<128xf32> to vector<1x128xf32>
    %402 = vector.broadcast %401 : vector<1x128xf32> to vector<14x128xf32>
    %403 = arith.mulf %400, %402 : vector<14x128xf32>
    %404 = arith.addf %399, %403 : vector<14x128xf32>
    %405 = vector.extract_strided_slice %394 {offsets = [2, 0], sizes = [14, 128], strides = [1, 1]} : vector<16x128xf32> to vector<14x128xf32>
    %406 = vector.shape_cast %18 : vector<128xf32> to vector<1x128xf32>
    %407 = vector.broadcast %406 : vector<1x128xf32> to vector<14x128xf32>
    %408 = arith.mulf %405, %407 : vector<14x128xf32>
    %409 = arith.addf %404, %408 : vector<14x128xf32>
    %410 = vector.shape_cast %20 : vector<128xf32> to vector<1x128xf32>
    %411 = vector.broadcast %410 : vector<1x128xf32> to vector<14x128xf32>
    %412 = arith.addf %409, %411 : vector<14x128xf32>
    %cst_103 = arith.constant 0.000000e+00 : f32
    %413 = vector.broadcast %cst_103 : f32 to vector<14x128xf32>
    %414 = arith.maximumf %412, %413 : vector<14x128xf32>
    %c0_104 = arith.constant 0 : index
    %c5 = arith.constant 5 : index
    %c0_105 = arith.constant 0 : index
    %c0_106 = arith.constant 0 : index
    %415 = vector.load %arg6[%c0_104, %c5, %c0_105, %c0_106] : memref<1x7x14x128xf32, #tpu.memory_space<vmem>>, vector<1x1x14x128xf32>
    %416 = vector.shape_cast %415 : vector<1x1x14x128xf32> to vector<14x128xf32>
    %417 = vector.shape_cast %414 : vector<14x128xf32> to vector<1x1x14x128xf32>
    tpu.vector_store %arg6[%c0_104, %c5, %c0_105, %c0_106], %417 {strides = array<i32>} : memref<1x7x14x128xf32, #tpu.memory_space<vmem>>, vector<1x1x14x128xf32>,
    %c6_i32 = arith.constant 6 : i32
    %418 = arith.addi %21, %c6_i32 : i32
    %c1_i32_107 = arith.constant 1 : i32
    %419 = arith.muli %418, %c1_i32_107 : i32
    %c0_i32_108 = arith.constant 0 : i32
    %420 = arith.addi %419, %c0_i32_108 : i32
    %c0_109 = arith.constant 0 : index
    %421 = arith.index_cast %420 : i32 to index
    %c0_110 = arith.constant 0 : index
    %c0_111 = arith.constant 0 : index
    %422 = vector.load %arg3[%c0_109, %421, %c0_110, %c0_111] : memref<1x16x16x128xf32, #tpu.memory_space<vmem>>, vector<1x1x16x128xf32>
    %423 = vector.shape_cast %422 : vector<1x1x16x128xf32> to vector<16x128xf32>
    %424 = vector.extract_strided_slice %423 {offsets = [0, 0], sizes = [14, 128], strides = [1, 1]} : vector<16x128xf32> to vector<14x128xf32>
    %425 = vector.shape_cast %2 : vector<128xf32> to vector<1x128xf32>
    %426 = vector.broadcast %425 : vector<1x128xf32> to vector<14x128xf32>
    %427 = arith.mulf %424, %426 : vector<14x128xf32>
    %428 = vector.extract_strided_slice %423 {offsets = [1, 0], sizes = [14, 128], strides = [1, 1]} : vector<16x128xf32> to vector<14x128xf32>
    %429 = vector.shape_cast %4 : vector<128xf32> to vector<1x128xf32>
    %430 = vector.broadcast %429 : vector<1x128xf32> to vector<14x128xf32>
    %431 = arith.mulf %428, %430 : vector<14x128xf32>
    %432 = arith.addf %427, %431 : vector<14x128xf32>
    %433 = vector.extract_strided_slice %423 {offsets = [2, 0], sizes = [14, 128], strides = [1, 1]} : vector<16x128xf32> to vector<14x128xf32>
    %434 = vector.shape_cast %6 : vector<128xf32> to vector<1x128xf32>
    %435 = vector.broadcast %434 : vector<1x128xf32> to vector<14x128xf32>
    %436 = arith.mulf %433, %435 : vector<14x128xf32>
    %437 = arith.addf %432, %436 : vector<14x128xf32>
    %c1_i32_112 = arith.constant 1 : i32
    %438 = arith.addi %419, %c1_i32_112 : i32
    %c0_113 = arith.constant 0 : index
    %439 = arith.index_cast %438 : i32 to index
    %c0_114 = arith.constant 0 : index
    %c0_115 = arith.constant 0 : index
    %440 = vector.load %arg3[%c0_113, %439, %c0_114, %c0_115] : memref<1x16x16x128xf32, #tpu.memory_space<vmem>>, vector<1x1x16x128xf32>
    %441 = vector.shape_cast %440 : vector<1x1x16x128xf32> to vector<16x128xf32>
    %442 = vector.extract_strided_slice %441 {offsets = [0, 0], sizes = [14, 128], strides = [1, 1]} : vector<16x128xf32> to vector<14x128xf32>
    %443 = vector.shape_cast %8 : vector<128xf32> to vector<1x128xf32>
    %444 = vector.broadcast %443 : vector<1x128xf32> to vector<14x128xf32>
    %445 = arith.mulf %442, %444 : vector<14x128xf32>
    %446 = arith.addf %437, %445 : vector<14x128xf32>
    %447 = vector.extract_strided_slice %441 {offsets = [1, 0], sizes = [14, 128], strides = [1, 1]} : vector<16x128xf32> to vector<14x128xf32>
    %448 = vector.shape_cast %10 : vector<128xf32> to vector<1x128xf32>
    %449 = vector.broadcast %448 : vector<1x128xf32> to vector<14x128xf32>
    %450 = arith.mulf %447, %449 : vector<14x128xf32>
    %451 = arith.addf %446, %450 : vector<14x128xf32>
    %452 = vector.extract_strided_slice %441 {offsets = [2, 0], sizes = [14, 128], strides = [1, 1]} : vector<16x128xf32> to vector<14x128xf32>
    %453 = vector.shape_cast %12 : vector<128xf32> to vector<1x128xf32>
    %454 = vector.broadcast %453 : vector<1x128xf32> to vector<14x128xf32>
    %455 = arith.mulf %452, %454 : vector<14x128xf32>
    %456 = arith.addf %451, %455 : vector<14x128xf32>
    %c2_i32_116 = arith.constant 2 : i32
    %457 = arith.addi %419, %c2_i32_116 : i32
    %c0_117 = arith.constant 0 : index
    %458 = arith.index_cast %457 : i32 to index
    %c0_118 = arith.constant 0 : index
    %c0_119 = arith.constant 0 : index
    %459 = vector.load %arg3[%c0_117, %458, %c0_118, %c0_119] : memref<1x16x16x128xf32, #tpu.memory_space<vmem>>, vector<1x1x16x128xf32>
    %460 = vector.shape_cast %459 : vector<1x1x16x128xf32> to vector<16x128xf32>
    %461 = vector.extract_strided_slice %460 {offsets = [0, 0], sizes = [14, 128], strides = [1, 1]} : vector<16x128xf32> to vector<14x128xf32>
    %462 = vector.shape_cast %14 : vector<128xf32> to vector<1x128xf32>
    %463 = vector.broadcast %462 : vector<1x128xf32> to vector<14x128xf32>
    %464 = arith.mulf %461, %463 : vector<14x128xf32>
    %465 = arith.addf %456, %464 : vector<14x128xf32>
    %466 = vector.extract_strided_slice %460 {offsets = [1, 0], sizes = [14, 128], strides = [1, 1]} : vector<16x128xf32> to vector<14x128xf32>
    %467 = vector.shape_cast %16 : vector<128xf32> to vector<1x128xf32>
    %468 = vector.broadcast %467 : vector<1x128xf32> to vector<14x128xf32>
    %469 = arith.mulf %466, %468 : vector<14x128xf32>
    %470 = arith.addf %465, %469 : vector<14x128xf32>
    %471 = vector.extract_strided_slice %460 {offsets = [2, 0], sizes = [14, 128], strides = [1, 1]} : vector<16x128xf32> to vector<14x128xf32>
    %472 = vector.shape_cast %18 : vector<128xf32> to vector<1x128xf32>
    %473 = vector.broadcast %472 : vector<1x128xf32> to vector<14x128xf32>
    %474 = arith.mulf %471, %473 : vector<14x128xf32>
    %475 = arith.addf %470, %474 : vector<14x128xf32>
    %476 = vector.shape_cast %20 : vector<128xf32> to vector<1x128xf32>
    %477 = vector.broadcast %476 : vector<1x128xf32> to vector<14x128xf32>
    %478 = arith.addf %475, %477 : vector<14x128xf32>
    %cst_120 = arith.constant 0.000000e+00 : f32
    %479 = vector.broadcast %cst_120 : f32 to vector<14x128xf32>
    %480 = arith.maximumf %478, %479 : vector<14x128xf32>
    %c0_121 = arith.constant 0 : index
    %c6 = arith.constant 6 : index
    %c0_122 = arith.constant 0 : index
    %c0_123 = arith.constant 0 : index
    %481 = vector.load %arg6[%c0_121, %c6, %c0_122, %c0_123] : memref<1x7x14x128xf32, #tpu.memory_space<vmem>>, vector<1x1x14x128xf32>
    %482 = vector.shape_cast %481 : vector<1x1x14x128xf32> to vector<14x128xf32>
    %483 = vector.shape_cast %480 : vector<14x128xf32> to vector<1x1x14x128xf32>
    tpu.vector_store %arg6[%c0_121, %c6, %c0_122, %c0_123], %483 {strides = array<i32>} : memref<1x7x14x128xf32, #tpu.memory_space<vmem>>, vector<1x1x14x128xf32>,
    return
  }
  func.func @transform_0(%arg0: i32, %arg1: i32, %arg2: i32) -> (i32, i32, i32, i32) {
    %c0_i32 = arith.constant 0 : i32
    %c0_i32_0 = arith.constant 0 : i32
    %c0_i32_1 = arith.constant 0 : i32
    return %arg0, %c0_i32, %c0_i32_0, %arg1 : i32, i32, i32, i32
  }
  func.func @transform_1(%arg0: i32, %arg1: i32, %arg2: i32) -> (i32, i32, i32) {
    %c0_i32 = arith.constant 0 : i32
    %c0_i32_0 = arith.constant 0 : i32
    %c0_i32_1 = arith.constant 0 : i32
    return %c0_i32, %c0_i32_0, %arg1 : i32, i32, i32
  }
  func.func @transform_2(%arg0: i32, %arg1: i32, %arg2: i32) -> (i32, i32, i32) {
    %c0_i32 = arith.constant 0 : i32
    %c0_i32_0 = arith.constant 0 : i32
    %c0_i32_1 = arith.constant 0 : i32
    return %c0_i32, %c0_i32_0, %arg1 : i32, i32, i32
  }
  func.func @transform_3(%arg0: i32, %arg1: i32, %arg2: i32) -> (i32, i32, i32, i32) {
    %c0_i32 = arith.constant 0 : i32
    %c0_i32_0 = arith.constant 0 : i32
    return %arg0, %arg2, %c0_i32, %arg1 : i32, i32, i32, i32
  }
}

</mosaic_0001>

<llo_original>
// kernel: tpu_custom_call.1
$region0: #{tpu_custom_call.1}
  #allocation0 [shape = 'u32[]', space=smem, size = 0x4, offset = 0x4, fixed_abs, tag = 'smem constant byte address 0x4 - core index']
  #allocation1 [shape = 'u32[144,128]{1,0:T(1,128)}', space=vmem, size = 0x12000, scoped, tag = 'internal scratch']
  %s0 = inlined_call_operand.hbm [shape: f32[2,16,16,128], index: 0, kind: input, shape index: {}]
  %s1 = inlined_call_operand.hbm [shape: f32[3,3,128], index: 1, kind: input, shape index: {}]
  %s2 = inlined_call_operand.vmem [shape: f32[1,1,128], index: 2, kind: input, shape index: {}]
  %s3 = inlined_call_operand.vmem [shape: f32[2,14,14,128], index: 3, kind: output, shape index: {}]
  %s4 = sld [smem:[#allocation0]]
  $region53: #{tpu_custom_call.1} parent=0
    _
  %s6 = ssub.s32 1, %s4
  %s7 = scalar_select 0, %s6, %s4
  $region1: #{tpu_custom_call.1} parent=0
    #allocation2 [shape = 'u8[262144]{0}', space=vmem, size = 0x40000, scoped, tag = 'input window, operand 0']
    #allocation3 [shape = 's32[2]{0}', space=sflag, size = 0x8, scoped, tag = 'scoped memory for tpu_custom_call.1']
    #allocation4 [shape = 'u8[6144]{0}', space=vmem, size = 0x1800, scoped, tag = 'input window, operand 1, single buffered']
    #allocation5 [shape = 's32[1]{0}', space=sflag, size = 0x4, scoped, tag = 'scoped memory for tpu_custom_call.1']
    %8 = vsyncpa [#allocation3], 0
    %s9 = scalar_lea.sflag [#allocation3], 1
    %10 = vsyncpa %s9, 0
    %11 = vsyncpa [#allocation5], 0
    loop: start=0, step=1, limit=6
    $region2: #{tpu_custom_call.1} parent=1 // loop_pre_header
      _
    $region3: #{tpu_custom_call.1} parent=1 // loop_header
      %s13 = sphi 0, %s17
      %p14 = scmp.ge.s32.totalorder %s13, 6
      %s20 = sphi 0, %s39
      %s21 = sphi 0, %s35
      %s22 = sphi 0, %s31
      %s23 = sphi 0, %s20
      %s24 = sphi 0, %s21
      %s25 = sphi 0, %s22
      %s26 = sphi 0, %s23
      %s27 = sphi 0, %s24
      %s28 = sphi 0, %s25
      %s44 = sphi 0, %s46
      %s47 = sphi 0, %s44
      %s48 = sphi 0, %s47
      %s64 = sphi 0, %s48
      %s70 = sphi 0, %s72
      %s73 = sphi 0, %s70
      %s74 = sphi 0, %s73
      %s90 = sphi 0, %s74
      %s96 = sphi 0, %s98
      %s99 = sphi 0, %s96
      %s100 = sphi 0, %s99
      %s116 = sphi 0, %s100
      %s126 = sphi 0, %s128
      %s129 = sphi 0, %s126
      %s130 = sphi 0, %s129
      %s146 = sphi 0, %s130
    $region4: #{tpu_custom_call.1} parent=1 // loop_header_branch
      %16 = sbr.rel (%p14) target = $region8
    $region5: #{tpu_custom_call.1} parent=1 // loop_body
      %s18 = ssub.s32 %s13, 1
      %s19 = ssub.s32 %s13, 2
      %s29 = sadd.s32 1, %s22
      %p30 = scmp.ge.s32.totalorder %s29, 2
      %s31 = scalar_select %p30, 0, %s29
      %s32 = sadd.s32 1, %s21
      %s33 = scalar_select %p30, %s32, %s21
      %p34 = scmp.ge.s32.totalorder %s33, 1
      %s35 = scalar_select %p34, 0, %s33
      %s36 = sadd.s32 1, %s20
      %s37 = scalar_select %p34, %s36, %s20
      %p38 = scmp.ge.s32.totalorder %s37, 2
      %s39 = scalar_select %p38, 0, %s37
      %s40 = ssub.s32 %s20, %s39
      %s41 = ssub.s32 %s21, %s35
      %s42 = sor.u32 %s40, %s41
      %p43 = scmp.eq.s32.totalorder %s42, 0
      %s45 = sadd.s32 %s44, 1
      %s46 = scalar_select %p43, %s44, %s45
      %p49 = pneg %p43
      %p50 = scmp.eq.s32.totalorder %s13, 3
      %p51 = por %p49, %p50
      %p52 = scmp.ne.s32.totalorder %s44, %s47
      %p53 = scmp.eq.s32.totalorder %s13, 0
      %p54 = por %p52, %p53
      %p55 = scmp.ne.s32.totalorder %s44, %s47
      %p56 = scmp.eq.s32.totalorder %s18, 3
      %p57 = por %p55, %p56
      %p58 = scmp.ne.s32.totalorder %s47, %s48
      %p59 = scmp.eq.s32.totalorder %s18, 0
      %p60 = por %p58, %p59
      %p61 = scmp.ne.s32.totalorder %s47, %s48
      %p62 = scmp.eq.s32.totalorder %s19, 3
      %p63 = por %p61, %p62
      %p65 = scmp.ne.s32.totalorder %s48, %s64
      %p66 = scmp.eq.s32.totalorder %s19, 0
      %p67 = por %p65, %p66
      %s68 = ssub.s32 %s21, %s35
      %p69 = scmp.eq.s32.totalorder %s68, 0
      %s71 = sadd.s32 %s70, 1
      %s72 = scalar_select %p69, %s70, %s71
      %p75 = pneg %p69
      %p76 = scmp.eq.s32.totalorder %s13, 3
      %p77 = por %p75, %p76
      %p78 = scmp.ne.s32.totalorder %s70, %s73
      %p79 = scmp.eq.s32.totalorder %s13, 0
      %p80 = por %p78, %p79
      %p81 = scmp.ne.s32.totalorder %s70, %s73
      %p82 = scmp.eq.s32.totalorder %s18, 3
      %p83 = por %p81, %p82
      %p84 = scmp.ne.s32.totalorder %s73, %s74
      %p85 = scmp.eq.s32.totalorder %s18, 0
      %p86 = por %p84, %p85
      %p87 = scmp.ne.s32.totalorder %s73, %s74
      %p88 = scmp.eq.s32.totalorder %s19, 3
      %p89 = por %p87, %p88
      %p91 = scmp.ne.s32.totalorder %s74, %s90
      %p92 = scmp.eq.s32.totalorder %s19, 0
      %p93 = por %p91, %p92
      %s94 = ssub.s32 %s21, %s35
      %p95 = scmp.eq.s32.totalorder %s94, 0
      %s97 = sadd.s32 %s96, 1
      %s98 = scalar_select %p95, %s96, %s97
      %p101 = pneg %p95
      %p102 = scmp.eq.s32.totalorder %s13, 3
      %p103 = por %p101, %p102
      %p104 = scmp.ne.s32.totalorder %s96, %s99
      %p105 = scmp.eq.s32.totalorder %s13, 0
      %p106 = por %p104, %p105
      %p107 = scmp.ne.s32.totalorder %s96, %s99
      %p108 = scmp.eq.s32.totalorder %s18, 3
      %p109 = por %p107, %p108
      %p110 = scmp.ne.s32.totalorder %s99, %s100
      %p111 = scmp.eq.s32.totalorder %s18, 0
      %p112 = por %p110, %p111
      %p113 = scmp.ne.s32.totalorder %s99, %s100
      %p114 = scmp.eq.s32.totalorder %s19, 3
      %p115 = por %p113, %p114
      %p117 = scmp.ne.s32.totalorder %s100, %s116
      %p118 = scmp.eq.s32.totalorder %s19, 0
      %p119 = por %p117, %p118
      %s120 = ssub.s32 %s20, %s39
      %s121 = ssub.s32 %s22, %s31
      %s122 = sor.u32 %s120, %s121
      %s123 = ssub.s32 %s21, %s35
      %s124 = sor.u32 %s122, %s123
      %p125 = scmp.eq.s32.totalorder %s124, 0
      %s127 = sadd.s32 %s126, 1
      %s128 = scalar_select %p125, %s126, %s127
      %p131 = pneg %p125
      %p132 = scmp.eq.s32.totalorder %s13, 3
      %p133 = por %p131, %p132
      %p134 = scmp.ne.s32.totalorder %s126, %s129
      %p135 = scmp.eq.s32.totalorder %s13, 0
      %p136 = por %p134, %p135
      %p137 = scmp.ne.s32.totalorder %s126, %s129
      %p138 = scmp.eq.s32.totalorder %s18, 3
      %p139 = por %p137, %p138
      %p140 = scmp.ne.s32.totalorder %s129, %s130
      %p141 = scmp.eq.s32.totalorder %s18, 0
      %p142 = por %p140, %p141
      %p143 = scmp.ne.s32.totalorder %s129, %s130
      %p144 = scmp.eq.s32.totalorder %s19, 3
      %p145 = por %p143, %p144
      %p147 = scmp.ne.s32.totalorder %s130, %s146
      %p148 = scmp.eq.s32.totalorder %s19, 0
      %p149 = por %p147, %p148
      %p150 = scmp.le.s32.totalorder 1, %s13
      %p151 = scmp.lt.s32.totalorder %s13, 5
      %p152 = pnand %p150, %p151
      %p153 = pneg %p152
      // Predicated region
      $region9: #{tpu_custom_call.1} parent=5 // pred_check
        _
      $region10: #{tpu_custom_call.1} parent=5 // pred_check_branch
        %155 = sbr.rel (%p152) target = $region12
      $region11: #{tpu_custom_call.1} parent=5 // pred_region
        %s156 = ssub.s32 %s13, 1
        // Predicated region
        $region13: #{tpu_custom_call.1} parent=11 // pred_check
          %p157 = pneg %p86
        $region14: #{tpu_custom_call.1} parent=11 // pred_check_branch
          %159 = sbr.rel (%p157) target = $region16
        $region15: #{tpu_custom_call.1} parent=11 // pred_region
          %s161 = ssub.s32 192, 192
          %162 = vsyncadd [#allocation5], %s161
          %s163 = smul.addr %s24, 64
          %s164 = scalar_lea.hbm %s1, %s163
          %s165 = sshll.u32 [#allocation4], 4
          %s166 = int_to_ptr.vmem [resolvable:$true] %s165
          %171 = dma.hbm_to_vmem [thread:$0]  %s164, 192, %s166, [#allocation5], 64, 64, 4
        $region16: #{tpu_custom_call.1} parent=11 // pred_fallthru
          _
        // Predicated region
        $region17: #{tpu_custom_call.1} parent=11 // pred_check
          %p172 = pneg %p112
        $region18: #{tpu_custom_call.1} parent=11 // pred_check_branch
          %174 = sbr.rel (%p172) target = $region20
        $region19: #{tpu_custom_call.1} parent=11 // pred_region
          %p175 = scmp.lt.s32.totalorder %s24, 0
          %s176 = scalar_select %p175, %s24, 0
          %s177 = scalar_lea.vmem %s2, %s176
        $region20: #{tpu_custom_call.1} parent=11 // pred_fallthru
          _
      $region12: #{tpu_custom_call.1} parent=5 // pred_fallthru
        _
      %p178 = scmp.lt.s32.totalorder %s13, 4
      // Predicated region
      $region21: #{tpu_custom_call.1} parent=5 // pred_check
        %p179 = pneg %p178
      $region22: #{tpu_custom_call.1} parent=5 // pred_check_branch
        %181 = sbr.rel (%p179) target = $region24
      $region23: #{tpu_custom_call.1} parent=5 // pred_region
        // Predicated region
        $region25: #{tpu_custom_call.1} parent=23 // pred_check
          %p182 = pneg %p54
        $region26: #{tpu_custom_call.1} parent=23 // pred_check_branch
          %184 = sbr.rel (%p182) target = $region28
        $region27: #{tpu_custom_call.1} parent=23 // pred_region
          %s185 = sand.u32 %s44, 1
          %s186 = scalar_lea.sflag [#allocation3], %s185
          %s187 = sand.u32 %s44, 1
          %s188 = smul.addr %s187, 256
          %s189 = scalar_lea.vmem [#allocation2], %s188
          %s191 = ssub.s32 4096, 4096
          %192 = vsyncadd %s186, %s191
          %s193 = smul.addr %s20, 32
          %s194 = sadd.s32 %s21, %s193
          %s195 = smul.addr %s194, 128
          %s196 = scalar_lea.hbm %s0, %s195
          %s197 = sshll.u32 %s189, 4
          %s198 = int_to_ptr.vmem [resolvable:$true] %s197
          %203 = dma.hbm_to_vmem [thread:$0]  %s196, 4096, %s198, %s186, 128, 128, 8
        $region28: #{tpu_custom_call.1} parent=23 // pred_fallthru
          _
      $region24: #{tpu_custom_call.1} parent=5 // pred_fallthru
        _
      %p204 = scmp.le.s32.totalorder 1, %s13
      %p205 = scmp.lt.s32.totalorder %s13, 5
      %p206 = pnand %p204, %p205
      %p207 = pneg %p206
      // Predicated region
      $region29: #{tpu_custom_call.1} parent=5 // pred_check
        _
      $region30: #{tpu_custom_call.1} parent=5 // pred_check_branch
        %209 = sbr.rel (%p206) target = $region32
      $region31: #{tpu_custom_call.1} parent=5 // pred_region
        %s210 = ssub.s32 %s13, 1
        %s211 = sand.u32 %s47, 1
        %s212 = scalar_lea.sflag [#allocation3], %s211
        %s213 = sand.u32 %s47, 1
        %s214 = smul.addr %s213, 256
        %s215 = scalar_lea.vmem [#allocation2], %s214
        // Predicated region
        $region33: #{tpu_custom_call.1} parent=31 // pred_check
          %p216 = pneg %p60
        $region34: #{tpu_custom_call.1} parent=31 // pred_check_branch
          %218 = sbr.rel (%p216) target = $region36
        $region35: #{tpu_custom_call.1} parent=31 // pred_region
          %219 = dma.done %s212, 4096
        $region36: #{tpu_custom_call.1} parent=31 // pred_fallthru
          _
        // Predicated region
        $region37: #{tpu_custom_call.1} parent=31 // pred_check
          %p220 = pneg %p86
        $region38: #{tpu_custom_call.1} parent=31 // pred_check_branch
          %222 = sbr.rel (%p220) target = $region40
        $region39: #{tpu_custom_call.1} parent=31 // pred_region
          %223 = dma.done [#allocation5], 192
        $region40: #{tpu_custom_call.1} parent=31 // pred_fallthru
          _
        %s224 = sand.u32 %s47, 1
        %s225 = scalar_lea.sflag [#allocation3], %s224
        %s226 = sand.u32 %s47, 1
        %s227 = smul.addr %s226, 256
        %s228 = scalar_lea.vmem [#allocation2], %s227
        %p229 = pneg %p60
        %p230 = pneg %p57
        %p231 = pneg %p86
        %p232 = pneg %p83
        %p233 = scmp.lt.s32.totalorder %s24, 0
        %s234 = scalar_select %p233, %s24, 0
        %s235 = scalar_lea.vmem %s2, %s234
        %p236 = pneg %p112
        %p237 = pneg %p109
        %p238 = pneg %p142
        %p239 = pneg %p139
        %s240 = smul.u32 7, %s25
        %p241 = scmp.lt.s32.totalorder %s23, 1
        %s242 = scalar_select %p241, %s23, 1
        %p243 = scmp.lt.s32.totalorder %s240, 13
        %s244 = scalar_select %p243, %s240, 13
        %p245 = scmp.lt.s32.totalorder %s24, 0
        %s246 = scalar_select %p245, %s24, 0
        %s247 = smul.addr %s244, 2
        %s248 = sadd.s32 %s246, %s247
        %s249 = smul.addr %s242, 28
        %s250 = sadd.s32 %s248, %s249
        %s251 = smul.addr %s250, 8
        %s252 = scalar_lea.vmem %s3, %s251
        %p253 = scmp.lt.s32.totalorder %s24, 0
        %s254 = scalar_select %p253, %s24, 0
        %s255 = scalar_lea.vmem %s2, %s254
        %s256 = smul.u32 7, %s25
        %p257 = scmp.lt.s32.totalorder %s23, 1
        %s258 = scalar_select %p257, %s23, 1
        %p259 = scmp.lt.s32.totalorder %s256, 13
        %s260 = scalar_select %p259, %s256, 13
        %p261 = scmp.lt.s32.totalorder %s24, 0
        %s262 = scalar_select %p261, %s24, 0
        %s263 = smul.addr %s260, 2
        %s264 = sadd.s32 %s262, %s263
        %s265 = smul.addr %s258, 28
        %s266 = sadd.s32 %s264, %s265
        %s267 = smul.addr %s266, 8
        %s268 = scalar_lea.vmem %s3, %s267
        %s269 = smul.u32 7, %s25
        %v270 = vld [vmem:[#allocation4] sm:$0x7]
        %v271 = vld [vmem:[#allocation4 + $0x4] sm:$0x7]
        %v272 = vld [vmem:[#allocation4 + $0x8] sm:$0x7]
        %v273 = vld [vmem:[%s255] sm:$0x1]
        %s274 = smul.u32 %s25, 7
        %s275 = smul.u32 %s274, 16
        %s276 = scalar_lea.vmem %s215, %s275 [#allocation2]
        %v277 = vld [vmem:[%s276] sm:$0xff]
        %v278 = vld [vmem:[%s276 + $0x8] sm:$0xff]
        %v279 = vlaneseq
        %v280 = vshrl.u32 %v279, 7
        %v281 = vsub.s32 0, %v280
        %v282 = vrot.slane %v270, %v281
        %v283 = vmul.f32 %v277, %v282
        %v284 = vmul.f32 %v278, %v282
        %v285 = vlaneseq
        %v286 = vshrl.u32 %v285, 7
        %v287 = vsub.s32 1, %v286
        %v288 = vrot.slane %v270, %v287
        %v289 = vmul.f32 %v277, %v288
        %v290 = vmul.f32 %v278, %v288
        %vm293 = vcmask 1046528
        %v294 = vrot.slane %v289, 1
        %v295 = vrot.slane %v290, 1
        %v296 = vsel %vm293, %v294, %v295
        %v299 = vadd.f32 %v283, %v296
        %v300 = vadd.f32 %v284, %v295
        %v301 = vlaneseq
        %v302 = vshrl.u32 %v301, 7
        %v303 = vsub.s32 2, %v302
        %v304 = vrot.slane %v270, %v303
        %v305 = vmul.f32 %v277, %v304
        %v306 = vmul.f32 %v278, %v304
        %vm309 = vcmask 1045504
        %v310 = vrot.slane %v305, 2
        %v311 = vrot.slane %v306, 2
        %v312 = vsel %vm309, %v310, %v311
        %v315 = vadd.f32 %v299, %v312
        %v316 = vadd.f32 %v300, %v311
        %s317 = sadd.s32 %s274, 1
        %s318 = smul.u32 %s317, 16
        %s319 = scalar_lea.vmem %s215, %s318 [#allocation2]
        %v320 = vld [vmem:[%s319] sm:$0xff]
        %v321 = vld [vmem:[%s319 + $0x8] sm:$0xff]
        %v322 = vlaneseq
        %v323 = vshrl.u32 %v322, 7
        %v324 = vsub.s32 0, %v323
        %v325 = vrot.slane %v271, %v324
        %v326 = vmul.f32 %v320, %v325
        %v327 = vmul.f32 %v321, %v325
        %v328 = vadd.f32 %v315, %v326
        %v329 = vadd.f32 %v316, %v327
        %v330 = vlaneseq
        %v331 = vshrl.u32 %v330, 7
        %v332 = vsub.s32 1, %v331
        %v333 = vrot.slane %v271, %v332
        %v334 = vmul.f32 %v320, %v333
        %v335 = vmul.f32 %v321, %v333
        %v338 = vrot.slane %v334, 1
        %v339 = vrot.slane %v335, 1
        %v340 = vsel %vm293, %v338, %v339
        %v343 = vadd.f32 %v328, %v340
        %v344 = vadd.f32 %v329, %v339
        %v345 = vlaneseq
        %v346 = vshrl.u32 %v345, 7
        %v347 = vsub.s32 2, %v346
        %v348 = vrot.slane %v271, %v347
        %v349 = vmul.f32 %v320, %v348
        %v350 = vmul.f32 %v321, %v348
        %v353 = vrot.slane %v349, 2
        %v354 = vrot.slane %v350, 2
        %v355 = vsel %vm309, %v353, %v354
        %v358 = vadd.f32 %v343, %v355
        %v359 = vadd.f32 %v344, %v354
        %s360 = sadd.s32 %s274, 2
        %s361 = smul.u32 %s360, 16
        %s362 = scalar_lea.vmem %s215, %s361 [#allocation2]
        %v363 = vld [vmem:[%s362] sm:$0xff]
        %v364 = vld [vmem:[%s362 + $0x8] sm:$0xff]
        %v365 = vlaneseq
        %v366 = vshrl.u32 %v365, 7
        %v367 = vsub.s32 0, %v366
        %v368 = vrot.slane %v272, %v367
        %v369 = vmul.f32 %v363, %v368
        %v370 = vmul.f32 %v364, %v368
        %v371 = vadd.f32 %v358, %v369
        %v372 = vadd.f32 %v359, %v370
        %v373 = vlaneseq
        %v374 = vshrl.u32 %v373, 7
        %v375 = vsub.s32 1, %v374
        %v376 = vrot.slane %v272, %v375
        %v377 = vmul.f32 %v363, %v376
        %v378 = vmul.f32 %v364, %v376
        %v381 = vrot.slane %v377, 1
        %v382 = vrot.slane %v378, 1
        %v383 = vsel %vm293, %v381, %v382
        %v386 = vadd.f32 %v371, %v383
        %v387 = vadd.f32 %v372, %v382
        %v388 = vlaneseq
        %v389 = vshrl.u32 %v388, 7
        %v390 = vsub.s32 2, %v389
        %v391 = vrot.slane %v272, %v390
        %v392 = vmul.f32 %v363, %v391
        %v393 = vmul.f32 %v364, %v391
        %v396 = vrot.slane %v392, 2
        %v397 = vrot.slane %v393, 2
        %v398 = vsel %vm309, %v396, %v397
        %v401 = vadd.f32 %v386, %v398
        %v402 = vadd.f32 %v387, %v397
        %v404 = vlaneseq
        %v405 = vshrl.u32 %v404, 7
        %v406 = vsub.s32 0, %v405
        %v407 = vrot.slane %v273, %v406
        %v409 = vadd.f32 %v401, %v407
        %v410 = vadd.f32 %v402, %v407
        %v411 = vmax.f32 %v409, 0.0
        %v412 = vmax.f32 %v410, 0.0
        %413 = vst [vmem:[%s268] sm:$0xff] %v411
        %414 = vst [vmem:[%s268 + $0x8] sm:$0x3f] %v412
        %v415 = vld [vmem:[%s319] sm:$0xff]
        %v416 = vld [vmem:[%s319 + $0x8] sm:$0xff]
        %v417 = vmul.f32 %v415, %v282
        %v418 = vmul.f32 %v416, %v282
        %v419 = vmul.f32 %v415, %v288
        %v420 = vmul.f32 %v416, %v288
        %v423 = vrot.slane %v419, 1
        %v424 = vrot.slane %v420, 1
        %v425 = vsel %vm293, %v423, %v424
        %v428 = vadd.f32 %v417, %v425
        %v429 = vadd.f32 %v418, %v424
        %v430 = vmul.f32 %v415, %v304
        %v431 = vmul.f32 %v416, %v304
        %v434 = vrot.slane %v430, 2
        %v435 = vrot.slane %v431, 2
        %v436 = vsel %vm309, %v434, %v435
        %v439 = vadd.f32 %v428, %v436
        %v440 = vadd.f32 %v429, %v435
        %v441 = vld [vmem:[%s362] sm:$0xff]
        %v442 = vld [vmem:[%s362 + $0x8] sm:$0xff]
        %v443 = vmul.f32 %v441, %v325
        %v444 = vmul.f32 %v442, %v325
        %v445 = vadd.f32 %v439, %v443
        %v446 = vadd.f32 %v440, %v444
        %v447 = vmul.f32 %v441, %v333
        %v448 = vmul.f32 %v442, %v333
        %v451 = vrot.slane %v447, 1
        %v452 = vrot.slane %v448, 1
        %v453 = vsel %vm293, %v451, %v452
        %v456 = vadd.f32 %v445, %v453
        %v457 = vadd.f32 %v446, %v452
        %v458 = vmul.f32 %v441, %v348
        %v459 = vmul.f32 %v442, %v348
        %v462 = vrot.slane %v458, 2
        %v463 = vrot.slane %v459, 2
        %v464 = vsel %vm309, %v462, %v463
        %v467 = vadd.f32 %v456, %v464
        %v468 = vadd.f32 %v457, %v463
        %s469 = sadd.s32 %s274, 3
        %s470 = smul.u32 %s469, 16
        %s471 = scalar_lea.vmem %s215, %s470 [#allocation2]
        %v472 = vld [vmem:[%s471] sm:$0xff]
        %v473 = vld [vmem:[%s471 + $0x8] sm:$0xff]
        %v474 = vmul.f32 %v472, %v368
        %v475 = vmul.f32 %v473, %v368
        %v476 = vadd.f32 %v467, %v474
        %v477 = vadd.f32 %v468, %v475
        %v478 = vmul.f32 %v472, %v376
        %v479 = vmul.f32 %v473, %v376
        %v482 = vrot.slane %v478, 1
        %v483 = vrot.slane %v479, 1
        %v484 = vsel %vm293, %v482, %v483
        %v487 = vadd.f32 %v476, %v484
        %v488 = vadd.f32 %v477, %v483
        %v489 = vmul.f32 %v472, %v391
        %v490 = vmul.f32 %v473, %v391
        %v493 = vrot.slane %v489, 2
        %v494 = vrot.slane %v490, 2
        %v495 = vsel %vm309, %v493, %v494
        %v498 = vadd.f32 %v487, %v495
        %v499 = vadd.f32 %v488, %v494
        %v500 = vadd.f32 %v498, %v407
        %v501 = vadd.f32 %v499, %v407
        %v502 = vmax.f32 %v500, 0.0
        %v503 = vmax.f32 %v501, 0.0
        %s504 = scalar_lea.vmem %s268, 16
        %505 = vst [vmem:[%s504] sm:$0xff] %v502
        %506 = vst [vmem:[%s504 + $0x8] sm:$0x3f] %v503
        %v507 = vld [vmem:[%s362] sm:$0xff]
        %v508 = vld [vmem:[%s362 + $0x8] sm:$0xff]
        %v509 = vmul.f32 %v507, %v282
        %v510 = vmul.f32 %v508, %v282
        %v511 = vmul.f32 %v507, %v288
        %v512 = vmul.f32 %v508, %v288
        %v515 = vrot.slane %v511, 1
        %v516 = vrot.slane %v512, 1
        %v517 = vsel %vm293, %v515, %v516
        %v520 = vadd.f32 %v509, %v517
        %v521 = vadd.f32 %v510, %v516
        %v522 = vmul.f32 %v507, %v304
        %v523 = vmul.f32 %v508, %v304
        %v526 = vrot.slane %v522, 2
        %v527 = vrot.slane %v523, 2
        %v528 = vsel %vm309, %v526, %v527
        %v531 = vadd.f32 %v520, %v528
        %v532 = vadd.f32 %v521, %v527
        %v533 = vld [vmem:[%s471] sm:$0xff]
        %v534 = vld [vmem:[%s471 + $0x8] sm:$0xff]
        %v535 = vmul.f32 %v533, %v325
        %v536 = vmul.f32 %v534, %v325
        %v537 = vadd.f32 %v531, %v535
        %v538 = vadd.f32 %v532, %v536
        %v539 = vmul.f32 %v533, %v333
        %v540 = vmul.f32 %v534, %v333
        %v543 = vrot.slane %v539, 1
        %v544 = vrot.slane %v540, 1
        %v545 = vsel %vm293, %v543, %v544
        %v548 = vadd.f32 %v537, %v545
        %v549 = vadd.f32 %v538, %v544
        %v550 = vmul.f32 %v533, %v348
        %v551 = vmul.f32 %v534, %v348
        %v554 = vrot.slane %v550, 2
        %v555 = vrot.slane %v551, 2
        %v556 = vsel %vm309, %v554, %v555
        %v559 = vadd.f32 %v548, %v556
        %v560 = vadd.f32 %v549, %v555
        %s561 = sadd.s32 %s274, 4
        %s562 = smul.u32 %s561, 16
        %s563 = scalar_lea.vmem %s215, %s562 [#allocation2]
        %v564 = vld [vmem:[%s563] sm:$0xff]
        %v565 = vld [vmem:[%s563 + $0x8] sm:$0xff]
        %v566 = vmul.f32 %v564, %v368
        %v567 = vmul.f32 %v565, %v368
        %v568 = vadd.f32 %v559, %v566
        %v569 = vadd.f32 %v560, %v567
        %v570 = vmul.f32 %v564, %v376
        %v571 = vmul.f32 %v565, %v376
        %v574 = vrot.slane %v570, 1
        %v575 = vrot.slane %v571, 1
        %v576 = vsel %vm293, %v574, %v575
        %v579 = vadd.f32 %v568, %v576
        %v580 = vadd.f32 %v569, %v575
        %v581 = vmul.f32 %v564, %v391
        %v582 = vmul.f32 %v565, %v391
        %v585 = vrot.slane %v581, 2
        %v586 = vrot.slane %v582, 2
        %v587 = vsel %vm309, %v585, %v586
        %v590 = vadd.f32 %v579, %v587
        %v591 = vadd.f32 %v580, %v586
        %v592 = vadd.f32 %v590, %v407
        %v593 = vadd.f32 %v591, %v407
        %v594 = vmax.f32 %v592, 0.0
        %v595 = vmax.f32 %v593, 0.0
        %s596 = scalar_lea.vmem %s268, 32
        %597 = vst [vmem:[%s596] sm:$0xff] %v594
        %598 = vst [vmem:[%s596 + $0x8] sm:$0x3f] %v595
        %v599 = vld [vmem:[%s471] sm:$0xff]
        %v600 = vld [vmem:[%s471 + $0x8] sm:$0xff]
        %v601 = vmul.f32 %v599, %v282
        %v602 = vmul.f32 %v600, %v282
        %v603 = vmul.f32 %v599, %v288
        %v604 = vmul.f32 %v600, %v288
        %v607 = vrot.slane %v603, 1
        %v608 = vrot.slane %v604, 1
        %v609 = vsel %vm293, %v607, %v608
        %v612 = vadd.f32 %v601, %v609
        %v613 = vadd.f32 %v602, %v608
        %v614 = vmul.f32 %v599, %v304
        %v615 = vmul.f32 %v600, %v304
        %v618 = vrot.slane %v614, 2
        %v619 = vrot.slane %v615, 2
        %v620 = vsel %vm309, %v618, %v619
        %v623 = vadd.f32 %v612, %v620
        %v624 = vadd.f32 %v613, %v619
        %v625 = vld [vmem:[%s563] sm:$0xff]
        %v626 = vld [vmem:[%s563 + $0x8] sm:$0xff]
        %v627 = vmul.f32 %v625, %v325
        %v628 = vmul.f32 %v626, %v325
        %v629 = vadd.f32 %v623, %v627
        %v630 = vadd.f32 %v624, %v628
        %v631 = vmul.f32 %v625, %v333
        %v632 = vmul.f32 %v626, %v333
        %v635 = vrot.slane %v631, 1
        %v636 = vrot.slane %v632, 1
        %v637 = vsel %vm293, %v635, %v636
        %v640 = vadd.f32 %v629, %v637
        %v641 = vadd.f32 %v630, %v636
        %v642 = vmul.f32 %v625, %v348
        %v643 = vmul.f32 %v626, %v348
        %v646 = vrot.slane %v642, 2
        %v647 = vrot.slane %v643, 2
        %v648 = vsel %vm309, %v646, %v647
        %v651 = vadd.f32 %v640, %v648
        %v652 = vadd.f32 %v641, %v647
        %s653 = sadd.s32 %s274, 5
        %s654 = smul.u32 %s653, 16
        %s655 = scalar_lea.vmem %s215, %s654 [#allocation2]
        %v656 = vld [vmem:[%s655] sm:$0xff]
        %v657 = vld [vmem:[%s655 + $0x8] sm:$0xff]
        %v658 = vmul.f32 %v656, %v368
        %v659 = vmul.f32 %v657, %v368
        %v660 = vadd.f32 %v651, %v658
        %v661 = vadd.f32 %v652, %v659
        %v662 = vmul.f32 %v656, %v376
        %v663 = vmul.f32 %v657, %v376
        %v666 = vrot.slane %v662, 1
        %v667 = vrot.slane %v663, 1
        %v668 = vsel %vm293, %v666, %v667
        %v671 = vadd.f32 %v660, %v668
        %v672 = vadd.f32 %v661, %v667
        %v673 = vmul.f32 %v656, %v391
        %v674 = vmul.f32 %v657, %v391
        %v677 = vrot.slane %v673, 2
        %v678 = vrot.slane %v674, 2
        %v679 = vsel %vm309, %v677, %v678
        %v682 = vadd.f32 %v671, %v679
        %v683 = vadd.f32 %v672, %v678
        %v684 = vadd.f32 %v682, %v407
        %v685 = vadd.f32 %v683, %v407
        %v686 = vmax.f32 %v684, 0.0
        %v687 = vmax.f32 %v685, 0.0
        %s688 = scalar_lea.vmem %s268, 48
        %689 = vst [vmem:[%s688] sm:$0xff] %v686
        %690 = vst [vmem:[%s688 + $0x8] sm:$0x3f] %v687
        %v691 = vld [vmem:[%s563] sm:$0xff]
        %v692 = vld [vmem:[%s563 + $0x8] sm:$0xff]
        %v693 = vmul.f32 %v691, %v282
        %v694 = vmul.f32 %v692, %v282
        %v695 = vmul.f32 %v691, %v288
        %v696 = vmul.f32 %v692, %v288
        %v699 = vrot.slane %v695, 1
        %v700 = vrot.slane %v696, 1
        %v701 = vsel %vm293, %v699, %v700
        %v704 = vadd.f32 %v693, %v701
        %v705 = vadd.f32 %v694, %v700
        %v706 = vmul.f32 %v691, %v304
        %v707 = vmul.f32 %v692, %v304
        %v710 = vrot.slane %v706, 2
        %v711 = vrot.slane %v707, 2
        %v712 = vsel %vm309, %v710, %v711
        %v715 = vadd.f32 %v704, %v712
        %v716 = vadd.f32 %v705, %v711
        %v717 = vld [vmem:[%s655] sm:$0xff]
        %v718 = vld [vmem:[%s655 + $0x8] sm:$0xff]
        %v719 = vmul.f32 %v717, %v325
        %v720 = vmul.f32 %v718, %v325
        %v721 = vadd.f32 %v715, %v719
        %v722 = vadd.f32 %v716, %v720
        %v723 = vmul.f32 %v717, %v333
        %v724 = vmul.f32 %v718, %v333
        %v727 = vrot.slane %v723, 1
        %v728 = vrot.slane %v724, 1
        %v729 = vsel %vm293, %v727, %v728
        %v732 = vadd.f32 %v721, %v729
        %v733 = vadd.f32 %v722, %v728
        %v734 = vmul.f32 %v717, %v348
        %v735 = vmul.f32 %v718, %v348
        %v738 = vrot.slane %v734, 2
        %v739 = vrot.slane %v735, 2
        %v740 = vsel %vm309, %v738, %v739
        %v743 = vadd.f32 %v732, %v740
        %v744 = vadd.f32 %v733, %v739
        %s745 = sadd.s32 %s274, 6
        %s746 = smul.u32 %s745, 16
        %s747 = scalar_lea.vmem %s215, %s746 [#allocation2]
        %v748 = vld [vmem:[%s747] sm:$0xff]
        %v749 = vld [vmem:[%s747 + $0x8] sm:$0xff]
        %v750 = vmul.f32 %v748, %v368
        %v751 = vmul.f32 %v749, %v368
        %v752 = vadd.f32 %v743, %v750
        %v753 = vadd.f32 %v744, %v751
        %v754 = vmul.f32 %v748, %v376
        %v755 = vmul.f32 %v749, %v376
        %v758 = vrot.slane %v754, 1
        %v759 = vrot.slane %v755, 1
        %v760 = vsel %vm293, %v758, %v759
        %v763 = vadd.f32 %v752, %v760
        %v764 = vadd.f32 %v753, %v759
        %v765 = vmul.f32 %v748, %v391
        %v766 = vmul.f32 %v749, %v391
        %v769 = vrot.slane %v765, 2
        %v770 = vrot.slane %v766, 2
        %v771 = vsel %vm309, %v769, %v770
        %v774 = vadd.f32 %v763, %v771
        %v775 = vadd.f32 %v764, %v770
        %v776 = vadd.f32 %v774, %v407
        %v777 = vadd.f32 %v775, %v407
        %v778 = vmax.f32 %v776, 0.0
        %v779 = vmax.f32 %v777, 0.0
        %s780 = scalar_lea.vmem %s268, 64
        %781 = vst [vmem:[%s780] sm:$0xff] %v778
        %782 = vst [vmem:[%s780 + $0x8] sm:$0x3f] %v779
        %v783 = vld [vmem:[%s655] sm:$0xff]
        %v784 = vld [vmem:[%s655 + $0x8] sm:$0xff]
        %v785 = vmul.f32 %v783, %v282
        %v786 = vmul.f32 %v784, %v282
        %v787 = vmul.f32 %v783, %v288
        %v788 = vmul.f32 %v784, %v288
        %v791 = vrot.slane %v787, 1
        %v792 = vrot.slane %v788, 1
        %v793 = vsel %vm293, %v791, %v792
        %v796 = vadd.f32 %v785, %v793
        %v797 = vadd.f32 %v786, %v792
        %v798 = vmul.f32 %v783, %v304
        %v799 = vmul.f32 %v784, %v304
        %v802 = vrot.slane %v798, 2
        %v803 = vrot.slane %v799, 2
        %v804 = vsel %vm309, %v802, %v803
        %v807 = vadd.f32 %v796, %v804
        %v808 = vadd.f32 %v797, %v803
        %v809 = vld [vmem:[%s747] sm:$0xff]
        %v810 = vld [vmem:[%s747 + $0x8] sm:$0xff]
        %v811 = vmul.f32 %v809, %v325
        %v812 = vmul.f32 %v810, %v325
        %v813 = vadd.f32 %v807, %v811
        %v814 = vadd.f32 %v808, %v812
        %v815 = vmul.f32 %v809, %v333
        %v816 = vmul.f32 %v810, %v333
        %v819 = vrot.slane %v815, 1
        %v820 = vrot.slane %v816, 1
        %v821 = vsel %vm293, %v819, %v820
        %v824 = vadd.f32 %v813, %v821
        %v825 = vadd.f32 %v814, %v820
        %v826 = vmul.f32 %v809, %v348
        %v827 = vmul.f32 %v810, %v348
        %v830 = vrot.slane %v826, 2
        %v831 = vrot.slane %v827, 2
        %v832 = vsel %vm309, %v830, %v831
        %v835 = vadd.f32 %v824, %v832
        %v836 = vadd.f32 %v825, %v831
        %s837 = sadd.s32 %s274, 7
        %s838 = smul.u32 %s837, 16
        %s839 = scalar_lea.vmem %s215, %s838 [#allocation2]
        %v840 = vld [vmem:[%s839] sm:$0xff]
        %v841 = vld [vmem:[%s839 + $0x8] sm:$0xff]
        %v842 = vmul.f32 %v840, %v368
        %v843 = vmul.f32 %v841, %v368
        %v844 = vadd.f32 %v835, %v842
        %v845 = vadd.f32 %v836, %v843
        %v846 = vmul.f32 %v840, %v376
        %v847 = vmul.f32 %v841, %v376
        %v850 = vrot.slane %v846, 1
        %v851 = vrot.slane %v847, 1
        %v852 = vsel %vm293, %v850, %v851
        %v855 = vadd.f32 %v844, %v852
        %v856 = vadd.f32 %v845, %v851
        %v857 = vmul.f32 %v840, %v391
        %v858 = vmul.f32 %v841, %v391
        %v861 = vrot.slane %v857, 2
        %v862 = vrot.slane %v858, 2
        %v863 = vsel %vm309, %v861, %v862
        %v866 = vadd.f32 %v855, %v863
        %v867 = vadd.f32 %v856, %v862
        %v868 = vadd.f32 %v866, %v407
        %v869 = vadd.f32 %v867, %v407
        %v870 = vmax.f32 %v868, 0.0
        %v871 = vmax.f32 %v869, 0.0
        %s872 = scalar_lea.vmem %s268, 80
        %873 = vst [vmem:[%s872] sm:$0xff] %v870
        %874 = vst [vmem:[%s872 + $0x8] sm:$0x3f] %v871
        %v875 = vld [vmem:[%s747] sm:$0xff]
        %v876 = vld [vmem:[%s747 + $0x8] sm:$0xff]
        %v877 = vmul.f32 %v875, %v282
        %v878 = vmul.f32 %v876, %v282
        %v879 = vmul.f32 %v875, %v288
        %v880 = vmul.f32 %v876, %v288
        %v883 = vrot.slane %v879, 1
        %v884 = vrot.slane %v880, 1
        %v885 = vsel %vm293, %v883, %v884
        %v888 = vadd.f32 %v877, %v885
        %v889 = vadd.f32 %v878, %v884
        %v890 = vmul.f32 %v875, %v304
        %v891 = vmul.f32 %v876, %v304
        %v894 = vrot.slane %v890, 2
        %v895 = vrot.slane %v891, 2
        %v896 = vsel %vm309, %v894, %v895
        %v899 = vadd.f32 %v888, %v896
        %v900 = vadd.f32 %v889, %v895
        %v901 = vld [vmem:[%s839] sm:$0xff]
        %v902 = vld [vmem:[%s839 + $0x8] sm:$0xff]
        %v903 = vmul.f32 %v901, %v325
        %v904 = vmul.f32 %v902, %v325
        %v905 = vadd.f32 %v899, %v903
        %v906 = vadd.f32 %v900, %v904
        %v907 = vmul.f32 %v901, %v333
        %v908 = vmul.f32 %v902, %v333
        %v911 = vrot.slane %v907, 1
        %v912 = vrot.slane %v908, 1
        %v913 = vsel %vm293, %v911, %v912
        %v916 = vadd.f32 %v905, %v913
        %v917 = vadd.f32 %v906, %v912
        %v918 = vmul.f32 %v901, %v348
        %v919 = vmul.f32 %v902, %v348
        %v922 = vrot.slane %v918, 2
        %v923 = vrot.slane %v919, 2
        %v924 = vsel %vm309, %v922, %v923
        %v927 = vadd.f32 %v916, %v924
        %v928 = vadd.f32 %v917, %v923
        %s929 = sadd.s32 %s274, 8
        %s930 = smul.u32 %s929, 16
        %s931 = scalar_lea.vmem %s215, %s930 [#allocation2]
        %v932 = vld [vmem:[%s931] sm:$0xff]
        %v933 = vld [vmem:[%s931 + $0x8] sm:$0xff]
        %v934 = vmul.f32 %v932, %v368
        %v935 = vmul.f32 %v933, %v368
        %v936 = vadd.f32 %v927, %v934
        %v937 = vadd.f32 %v928, %v935
        %v938 = vmul.f32 %v932, %v376
        %v939 = vmul.f32 %v933, %v376
        %v942 = vrot.slane %v938, 1
        %v943 = vrot.slane %v939, 1
        %v944 = vsel %vm293, %v942, %v943
        %v947 = vadd.f32 %v936, %v944
        %v948 = vadd.f32 %v937, %v943
        %v949 = vmul.f32 %v932, %v391
        %v950 = vmul.f32 %v933, %v391
        %v953 = vrot.slane %v949, 2
        %v954 = vrot.slane %v950, 2
        %v955 = vsel %vm309, %v953, %v954
        %v958 = vadd.f32 %v947, %v955
        %v959 = vadd.f32 %v948, %v954
        %v960 = vadd.f32 %v958, %v407
        %v961 = vadd.f32 %v959, %v407
        %v962 = vmax.f32 %v960, 0.0
        %v963 = vmax.f32 %v961, 0.0
        %s964 = scalar_lea.vmem %s268, 96
        %965 = vst [vmem:[%s964] sm:$0xff] %v962
        %966 = vst [vmem:[%s964 + $0x8] sm:$0x3f] %v963
        %s967 = smul.u32 7, %s25
        %p968 = scmp.lt.s32.totalorder %s23, 1
        %s969 = scalar_select %p968, %s23, 1
        %p970 = scmp.lt.s32.totalorder %s967, 13
        %s971 = scalar_select %p970, %s967, 13
        %p972 = scmp.lt.s32.totalorder %s24, 0
        %s973 = scalar_select %p972, %s24, 0
        %s974 = smul.addr %s971, 2
        %s975 = sadd.s32 %s973, %s974
        %s976 = smul.addr %s969, 28
        %s977 = sadd.s32 %s975, %s976
        %s978 = smul.addr %s977, 8
        %s979 = scalar_lea.vmem %s3, %s978
        // Predicated region
        $region41: #{tpu_custom_call.1} parent=31 // pred_check
          %p980 = pneg %p139
        $region42: #{tpu_custom_call.1} parent=31 // pred_check_branch
          %982 = sbr.rel (%p980) target = $region44
        $region43: #{tpu_custom_call.1} parent=31 // pred_region
          %s983 = smul.u32 7, %s25
        $region44: #{tpu_custom_call.1} parent=31 // pred_fallthru
          _
      $region32: #{tpu_custom_call.1} parent=5 // pred_fallthru
        _
      %p984 = scmp.le.s32.totalorder 2, %s13
      // Predicated region
      $region45: #{tpu_custom_call.1} parent=5 // pred_check
        %p985 = pneg %p984
      $region46: #{tpu_custom_call.1} parent=5 // pred_check_branch
        %987 = sbr.rel (%p985) target = $region48
      $region47: #{tpu_custom_call.1} parent=5 // pred_region
        %s988 = ssub.s32 %s13, 2
        // Predicated region
        $region49: #{tpu_custom_call.1} parent=47 // pred_check
          %p989 = pneg %p145
        $region50: #{tpu_custom_call.1} parent=47 // pred_check_branch
          %991 = sbr.rel (%p989) target = $region52
        $region51: #{tpu_custom_call.1} parent=47 // pred_region
          %s992 = smul.u32 7, %s28
          %p993 = scmp.lt.s32.totalorder %s26, 1
          %s994 = scalar_select %p993, %s26, 1
          %p995 = scmp.lt.s32.totalorder %s992, 13
          %s996 = scalar_select %p995, %s992, 13
          %p997 = scmp.lt.s32.totalorder %s27, 0
          %s998 = scalar_select %p997, %s27, 0
          %s999 = smul.addr %s996, 2
          %s1000 = sadd.s32 %s998, %s999
          %s1001 = smul.addr %s994, 28
          %s1002 = sadd.s32 %s1000, %s1001
          %s1003 = smul.addr %s1002, 8
          %s1004 = scalar_lea.vmem %s3, %s1003
        $region52: #{tpu_custom_call.1} parent=47 // pred_fallthru
          _
      $region48: #{tpu_custom_call.1} parent=5 // pred_fallthru
        _
    $region6: #{tpu_custom_call.1} parent=1 // loop_footer
      %s17 = sadd.s32 1, %s13
    $region7: #{tpu_custom_call.1} parent=1 // loop_footer_branch
      %12 = sbr.rel target = $region3
    $region8: #{tpu_custom_call.1} parent=1 // loop_exit
      _
    %1005 = vsyncpa [#allocation3], 1
    %s1006 = scalar_lea.sflag [#allocation3], 1
    %1007 = vsyncpa %s1006, 1
    %1008 = vsyncpa [#allocation5], 1

</llo_original>
